<compile_context>
chip_gen: v7x
topology: tpu7x:2x2x1
jax: 0.10.0
libtpu: 0.0.40
codegen_flags: <defaults>
</compile_context>

<pallas_src>
import jax
import jax.numpy as jnp
from jax.experimental import pallas as pl
from jax.experimental.pallas import tpu as pltpu


def lstm_kernel(x_ref, w_ih_ref, w_hh_ref, b_ref, mul_ref, add_ref,
                w_out_ref, b_out_ref, out_ref):
    # x_ref    : (T, B, 1)      time-major input sequence (D_in == 1)
    # w_ih_ref : (1, 4*Hpad)    input->gates weights, gate-padded, i/f/o cols pre-scaled 0.5
    # w_hh_ref : (Hpad, 4*Hpad) hidden->gates weights (bf16), rows/gate-cols zero-padded,
    #                           i/f/o cols pre-scaled 0.5
    # b_ref    : (1, 4*Hpad)    combined bias (b_ih + b_hh), gate-padded, i/f/o pre-scaled 0.5
    # mul_ref  : (1, 4*Hpad)    [0.5, 0.5, 1.0, 0.5] per gate block
    # add_ref  : (1, 4*Hpad)    [0.5, 0.5, 0.0, 0.5] per gate block
    # w_out_ref: (1, Hpad)      final linear weights as a row (padded cols zero)
    # b_out_ref: (1, 1)
    # out_ref  : (B, 1)
    T, B, _ = x_ref.shape
    Hpad = w_out_ref.shape[1]

    # ---- Prologue: hoist the input projection out of the serial recurrence. ----
    # x_proj[t, b, :] = x[t, b, 0] * w_ih[0, :] + bias[0, :]   (one-shot VPU broadcast;
    # already carries the 0.5 scaling on i/f/o columns for the fused sigmoid-as-tanh).
    x = x_ref[...]                                    # (T, B, 1) f32
    w_row = w_ih_ref[...]                             # (1, 4*Hpad)
    bias = b_ref[...]                                 # (1, 4*Hpad)
    x_proj = x * w_row[None, :, :] + bias[None, :, :]  # (T, B, 4*Hpad), time-major

    mul_vec = mul_ref[...]                            # (1, 4*Hpad)
    add_vec = add_ref[...]                            # (1, 4*Hpad)

    h = jnp.zeros((B, Hpad), jnp.float32)
    c = jnp.zeros((B, Hpad), jnp.float32)

    # ---- Recurrence: fully unrolled (T is small and static). ----
    # Per step: one (B,Hpad)x(Hpad,4*Hpad) bf16 MXU matmul + one fused EUP tanh pass.
    # Padded lanes: gates are exactly 0 there, so i/f/o come out 0.5 (sigmoid(0)) but
    # g = 0 and c starts at 0, hence c and h stay exactly 0 in padded lanes. Do not put
    # nonzero values into padded bias/state columns or they leak through those 0.5 gates.
    for t in range(T):
        gates = x_proj[t] + jnp.dot(
            h.astype(jnp.bfloat16), w_hh_ref[...],
            preferred_element_type=jnp.float32,
        )                                             # (B, 4*Hpad), pre-scaled
        acts = jnp.tanh(gates) * mul_vec + add_vec    # sigmoid(i/f/o), tanh(g) in one pass
        i_g = acts[:, 0 * Hpad:1 * Hpad]
        f_g = acts[:, 1 * Hpad:2 * Hpad]
        g_g = acts[:, 2 * Hpad:3 * Hpad]
        o_g = acts[:, 3 * Hpad:4 * Hpad]
        c = f_g * c + i_g * g_g
        h = o_g * jnp.tanh(c)

    # ---- Final linear (Hpad -> 1) as VPU multiply + lane reduce (no N=1 MXU matmul). ----
    out_ref[...] = (
        jnp.sum(h * w_out_ref[...], axis=-1, keepdims=True) + b_out_ref[...]
    )


def lstm_model_forward(x, padded_params):
    """x: (B, T, 1) batch-first float32. Returns (B, 1)."""
    w_ih, w_hh, b, mul_vec, add_vec, w_out_row, b_out = padded_params
    B, T, D_in = x.shape
    assert D_in == 1, "kernel specialization: nn.LSTM input_size == 1"
    assert b_out.shape[1] == 1, "kernel specialization: output_size == 1"
    x_tm = jnp.transpose(x, (1, 0, 2))  # (T, B, 1) time-major for whole-slab step slices

    return pl.pallas_call(
        lstm_kernel,
        out_shape=jax.ShapeDtypeStruct((B, 1), jnp.float32),
        in_specs=[pl.BlockSpec(memory_space=pltpu.MemorySpace.VMEM)] * 8,
        out_specs=pl.BlockSpec(memory_space=pltpu.MemorySpace.VMEM),
    )(x_tm, w_ih, w_hh, b, mul_vec, add_vec, w_out_row, b_out)


def init_params(key, input_size, hidden, output_size):
    """Deterministic init mimicking PyTorch's uniform(-1/sqrt(H), 1/sqrt(H)).

    Returns the *unpadded* math parameters (used by the pure-JAX reference):
      w_ih (D_in,4H), w_hh (H,4H), b (1,4H), w_out (H,O), b_out (1,O),
    gate order [i, f, g, o] as in PyTorch.
    """
    k = 1.0 / jnp.sqrt(jnp.float32(hidden))
    ks = jax.random.split(key, 6)
    w_ih_t = jax.random.uniform(ks[0], (4 * hidden, input_size), jnp.float32, -k, k)
    w_hh_t = jax.random.uniform(ks[1], (4 * hidden, hidden), jnp.float32, -k, k)
    b_ih = jax.random.uniform(ks[2], (4 * hidden,), jnp.float32, -k, k)
    b_hh = jax.random.uniform(ks[3], (4 * hidden,), jnp.float32, -k, k)
    w_lin = jax.random.uniform(ks[4], (output_size, hidden), jnp.float32, -k, k)
    b_lin = jax.random.uniform(ks[5], (output_size,), jnp.float32, -k, k)

    w_ih = w_ih_t.T                               # (D_in, 4H)
    w_hh = w_hh_t.T                               # (H, 4H)
    b = (b_ih + b_hh).reshape(1, 4 * hidden)      # (1, 4H)
    w_out = w_lin.T                               # (H, O)
    b_out = b_lin.reshape(1, output_size)         # (1, O)
    return (w_ih, w_hh, b, w_out, b_out)


def pad_params(params, hidden, hidden_pad):
    """Pack params for the kernel:
      * zero-pad hidden dim to `hidden_pad` with 128-lane-aligned gate blocks,
      * pre-scale i/f/o gate columns by 0.5 (fused sigmoid-as-tanh trick),
      * store w_hh in bf16 for the MXU,
      * build the per-gate mul/add vectors for the fused activation,
      * transpose w_out to a (1, Hpad) row for the VPU reduce.
    """
    w_ih, w_hh, b, w_out, b_out = params
    pad_h = hidden_pad - hidden

    def pad_and_scale_gate_cols(m):
        # (..., 4H) -> (..., 4*Hpad); each gate block zero-padded; i/f/o scaled by 0.5.
        i, f, g, o = jnp.split(m, 4, axis=-1)
        widths = [(0, 0)] * (m.ndim - 1) + [(0, pad_h)]
        return jnp.concatenate(
            [jnp.pad(i, widths) * 0.5,
             jnp.pad(f, widths) * 0.5,
             jnp.pad(g, widths),
             jnp.pad(o, widths) * 0.5], axis=-1)

    w_ih_p = pad_and_scale_gate_cols(w_ih)                                  # (D_in, 4*Hpad) f32
    w_hh_p = pad_and_scale_gate_cols(
        jnp.pad(w_hh, ((0, pad_h), (0, 0)))).astype(jnp.bfloat16)           # (Hpad, 4*Hpad) bf16
    b_p = pad_and_scale_gate_cols(b)                                        # (1, 4*Hpad) f32

    def gate_const_vec(vi, vf, vg, vo):
        return jnp.concatenate(
            [jnp.full((1, hidden_pad), v, jnp.float32) for v in (vi, vf, vg, vo)],
            axis=-1)

    mul_vec = gate_const_vec(0.5, 0.5, 1.0, 0.5)                            # (1, 4*Hpad)
    add_vec = gate_const_vec(0.5, 0.5, 0.0, 0.5)                            # (1, 4*Hpad)

    w_out_row = jnp.pad(w_out, ((0, pad_h), (0, 0))).T                      # (O, Hpad), zero-padded cols
    return (w_ih_p, w_hh_p, b_p, mul_vec, add_vec, w_out_row, b_out)


def reference_forward(x, params):
    """Pure-JAX f32 reference with identical semantics (unpadded weights)."""
    w_ih, w_hh, b, w_out, b_out = params
    B, T, _ = x.shape
    H = w_hh.shape[0]
    h = jnp.zeros((B, H), jnp.float32)
    c = jnp.zeros((B, H), jnp.float32)
    for t in range(T):
        gates = x[:, t, :] @ w_ih + h @ w_hh + b
        i_g = jax.nn.sigmoid(gates[:, 0:H])
        f_g = jax.nn.sigmoid(gates[:, H:2 * H])
        g_g = jnp.tanh(gates[:, 2 * H:3 * H])
        o_g = jax.nn.sigmoid(gates[:, 3 * H:4 * H])
        c = f_g * c + i_g * g_g
        h = o_g * jnp.tanh(c)
    return h @ w_out + b_out


if __name__ == "__main__":
    INPUT_SIZE = 1
    HIDDEN = 50
    HIDDEN_PAD = 128    # lane-aligned hidden size for the kernel
    OUTPUT_SIZE = 1
    BATCH = 2
    SEQ = 8

    key = jax.random.PRNGKey(0)
    k_x, k_p = jax.random.split(key)

    x = jax.random.normal(k_x, (BATCH, SEQ, INPUT_SIZE), jnp.float32)
    params = init_params(k_p, INPUT_SIZE, HIDDEN, OUTPUT_SIZE)
    padded_params = pad_params(params, HIDDEN, HIDDEN_PAD)

    out = lstm_model_forward(x, padded_params)
    out = jax.block_until_ready(out)

    ref = reference_forward(x, params)
    assert out.shape == (BATCH, OUTPUT_SIZE)
    # Tolerance loosened vs. the f32 reference because the recurrent matmul runs with
    # bf16 operands (f32 accumulation) on the MXU.
    assert jnp.allclose(out, ref, atol=1e-2, rtol=2e-2), (out, ref)

    print("KERNEL_OK")
</pallas_src>

<mosaic_0001>
module attributes {stable_mosaic.version = 11 : i64} {
  func.func @lstm_kernel(%arg0: memref<8x2x1xf32, #tpu.memory_space<vmem>>, %arg1: memref<1x512xf32, #tpu.memory_space<vmem>>, %arg2: memref<128x512xbf16, #tpu.memory_space<vmem>>, %arg3: memref<1x512xf32, #tpu.memory_space<vmem>>, %arg4: memref<1x512xf32, #tpu.memory_space<vmem>>, %arg5: memref<1x512xf32, #tpu.memory_space<vmem>>, %arg6: memref<1x128xf32, #tpu.memory_space<vmem>>, %arg7: memref<1x1xf32, #tpu.memory_space<vmem>>, %arg8: memref<2x1xf32, #tpu.memory_space<vmem>>) attributes {dimension_semantics = [], scalar_prefetch = 0 : i64, scratch_operands = 0 : i64, tpu.core_type = #tpu.core_type<tc>} {
    %c0 = arith.constant 0 : index
    %c0_0 = arith.constant 0 : index
    %c0_1 = arith.constant 0 : index
    %0 = vector.load %arg0[%c0, %c0_0, %c0_1] : memref<8x2x1xf32, #tpu.memory_space<vmem>>, vector<8x2x1xf32>
    %c0_2 = arith.constant 0 : index
    %c0_3 = arith.constant 0 : index
    %1 = vector.load %arg1[%c0_2, %c0_3] : memref<1x512xf32, #tpu.memory_space<vmem>>, vector<1x512xf32>
    %c0_4 = arith.constant 0 : index
    %c0_5 = arith.constant 0 : index
    %2 = vector.load %arg3[%c0_4, %c0_5] : memref<1x512xf32, #tpu.memory_space<vmem>>, vector<1x512xf32>
    %3 = vector.shape_cast %1 : vector<1x512xf32> to vector<1x1x512xf32>
    %4 = vector.broadcast %0 : vector<8x2x1xf32> to vector<8x2x512xf32>
    %5 = vector.broadcast %3 : vector<1x1x512xf32> to vector<8x2x512xf32>
    %6 = arith.mulf %4, %5 : vector<8x2x512xf32>
    %7 = vector.shape_cast %2 : vector<1x512xf32> to vector<1x1x512xf32>
    %8 = vector.broadcast %7 : vector<1x1x512xf32> to vector<8x2x512xf32>
    %9 = arith.addf %6, %8 : vector<8x2x512xf32>
    %c0_6 = arith.constant 0 : index
    %c0_7 = arith.constant 0 : index
    %10 = vector.load %arg4[%c0_6, %c0_7] : memref<1x512xf32, #tpu.memory_space<vmem>>, vector<1x512xf32>
    %c0_8 = arith.constant 0 : index
    %c0_9 = arith.constant 0 : index
    %11 = vector.load %arg5[%c0_8, %c0_9] : memref<1x512xf32, #tpu.memory_space<vmem>>, vector<1x512xf32>
    %cst = arith.constant 0.000000e+00 : f32
    %12 = vector.broadcast %cst : f32 to vector<2x128xf32>
    %cst_10 = arith.constant 0.000000e+00 : f32
    %13 = vector.broadcast %cst_10 : f32 to vector<2x128xf32>
    %14 = vector.extract_strided_slice %9 {offsets = [0, 0, 0], sizes = [1, 2, 512], strides = [1, 1, 1]} : vector<8x2x512xf32> to vector<1x2x512xf32>
    %15 = vector.shape_cast %14 : vector<1x2x512xf32> to vector<2x512xf32>
    %16 = arith.truncf %12 : vector<2x128xf32> to vector<2x128xbf16>
    %c0_11 = arith.constant 0 : index
    %c0_12 = arith.constant 0 : index
    %17 = vector.load %arg2[%c0_11, %c0_12] : memref<128x512xbf16, #tpu.memory_space<vmem>>, vector<128x512xbf16>
    %cst_13 = arith.constant dense<0.000000e+00> : vector<2x512xf32>
    %18 = tpu.matmul %16, %17, %cst_13 {dimension_numbers = #tpu.dot_dimension_numbers<[1], [0], [0], [1], [0, 0, 1, 1], [], []>} : vector<2x128xbf16>, vector<128x512xbf16>, vector<2x512xf32> -> vector<2x512xf32>
    %19 = arith.addf %15, %18 : vector<2x512xf32>
    %20 = math.tanh %19 : vector<2x512xf32>
    %21 = vector.broadcast %10 : vector<1x512xf32> to vector<2x512xf32>
    %22 = arith.mulf %20, %21 : vector<2x512xf32>
    %23 = vector.broadcast %11 : vector<1x512xf32> to vector<2x512xf32>
    %24 = arith.addf %22, %23 : vector<2x512xf32>
    %25 = vector.extract_strided_slice %24 {offsets = [0, 0], sizes = [2, 128], strides = [1, 1]} : vector<2x512xf32> to vector<2x128xf32>
    %26 = vector.extract_strided_slice %24 {offsets = [0, 128], sizes = [2, 128], strides = [1, 1]} : vector<2x512xf32> to vector<2x128xf32>
    %27 = vector.extract_strided_slice %24 {offsets = [0, 256], sizes = [2, 128], strides = [1, 1]} : vector<2x512xf32> to vector<2x128xf32>
    %28 = vector.extract_strided_slice %24 {offsets = [0, 384], sizes = [2, 128], strides = [1, 1]} : vector<2x512xf32> to vector<2x128xf32>
    %29 = arith.mulf %26, %13 : vector<2x128xf32>
    %30 = arith.mulf %25, %27 : vector<2x128xf32>
    %31 = arith.addf %29, %30 : vector<2x128xf32>
    %32 = math.tanh %31 : vector<2x128xf32>
    %33 = arith.mulf %28, %32 : vector<2x128xf32>
    %34 = vector.extract_strided_slice %9 {offsets = [1, 0, 0], sizes = [1, 2, 512], strides = [1, 1, 1]} : vector<8x2x512xf32> to vector<1x2x512xf32>
    %35 = vector.shape_cast %34 : vector<1x2x512xf32> to vector<2x512xf32>
    %36 = arith.truncf %33 : vector<2x128xf32> to vector<2x128xbf16>
    %c0_14 = arith.constant 0 : index
    %c0_15 = arith.constant 0 : index
    %37 = vector.load %arg2[%c0_14, %c0_15] : memref<128x512xbf16, #tpu.memory_space<vmem>>, vector<128x512xbf16>
    %cst_16 = arith.constant dense<0.000000e+00> : vector<2x512xf32>
    %38 = tpu.matmul %36, %37, %cst_16 {dimension_numbers = #tpu.dot_dimension_numbers<[1], [0], [0], [1], [0, 0, 1, 1], [], []>} : vector<2x128xbf16>, vector<128x512xbf16>, vector<2x512xf32> -> vector<2x512xf32>
    %39 = arith.addf %35, %38 : vector<2x512xf32>
    %40 = math.tanh %39 : vector<2x512xf32>
    %41 = vector.broadcast %10 : vector<1x512xf32> to vector<2x512xf32>
    %42 = arith.mulf %40, %41 : vector<2x512xf32>
    %43 = vector.broadcast %11 : vector<1x512xf32> to vector<2x512xf32>
    %44 = arith.addf %42, %43 : vector<2x512xf32>
    %45 = vector.extract_strided_slice %44 {offsets = [0, 0], sizes = [2, 128], strides = [1, 1]} : vector<2x512xf32> to vector<2x128xf32>
    %46 = vector.extract_strided_slice %44 {offsets = [0, 128], sizes = [2, 128], strides = [1, 1]} : vector<2x512xf32> to vector<2x128xf32>
    %47 = vector.extract_strided_slice %44 {offsets = [0, 256], sizes = [2, 128], strides = [1, 1]} : vector<2x512xf32> to vector<2x128xf32>
    %48 = vector.extract_strided_slice %44 {offsets = [0, 384], sizes = [2, 128], strides = [1, 1]} : vector<2x512xf32> to vector<2x128xf32>
    %49 = arith.mulf %46, %31 : vector<2x128xf32>
    %50 = arith.mulf %45, %47 : vector<2x128xf32>
    %51 = arith.addf %49, %50 : vector<2x128xf32>
    %52 = math.tanh %51 : vector<2x128xf32>
    %53 = arith.mulf %48, %52 : vector<2x128xf32>
    %54 = vector.extract_strided_slice %9 {offsets = [2, 0, 0], sizes = [1, 2, 512], strides = [1, 1, 1]} : vector<8x2x512xf32> to vector<1x2x512xf32>
    %55 = vector.shape_cast %54 : vector<1x2x512xf32> to vector<2x512xf32>
    %56 = arith.truncf %53 : vector<2x128xf32> to vector<2x128xbf16>
    %c0_17 = arith.constant 0 : index
    %c0_18 = arith.constant 0 : index
    %57 = vector.load %arg2[%c0_17, %c0_18] : memref<128x512xbf16, #tpu.memory_space<vmem>>, vector<128x512xbf16>
    %cst_19 = arith.constant dense<0.000000e+00> : vector<2x512xf32>
    %58 = tpu.matmul %56, %57, %cst_19 {dimension_numbers = #tpu.dot_dimension_numbers<[1], [0], [0], [1], [0, 0, 1, 1], [], []>} : vector<2x128xbf16>, vector<128x512xbf16>, vector<2x512xf32> -> vector<2x512xf32>
    %59 = arith.addf %55, %58 : vector<2x512xf32>
    %60 = math.tanh %59 : vector<2x512xf32>
    %61 = vector.broadcast %10 : vector<1x512xf32> to vector<2x512xf32>
    %62 = arith.mulf %60, %61 : vector<2x512xf32>
    %63 = vector.broadcast %11 : vector<1x512xf32> to vector<2x512xf32>
    %64 = arith.addf %62, %63 : vector<2x512xf32>
    %65 = vector.extract_strided_slice %64 {offsets = [0, 0], sizes = [2, 128], strides = [1, 1]} : vector<2x512xf32> to vector<2x128xf32>
    %66 = vector.extract_strided_slice %64 {offsets = [0, 128], sizes = [2, 128], strides = [1, 1]} : vector<2x512xf32> to vector<2x128xf32>
    %67 = vector.extract_strided_slice %64 {offsets = [0, 256], sizes = [2, 128], strides = [1, 1]} : vector<2x512xf32> to vector<2x128xf32>
    %68 = vector.extract_strided_slice %64 {offsets = [0, 384], sizes = [2, 128], strides = [1, 1]} : vector<2x512xf32> to vector<2x128xf32>
    %69 = arith.mulf %66, %51 : vector<2x128xf32>
    %70 = arith.mulf %65, %67 : vector<2x128xf32>
    %71 = arith.addf %69, %70 : vector<2x128xf32>
    %72 = math.tanh %71 : vector<2x128xf32>
    %73 = arith.mulf %68, %72 : vector<2x128xf32>
    %74 = vector.extract_strided_slice %9 {offsets = [3, 0, 0], sizes = [1, 2, 512], strides = [1, 1, 1]} : vector<8x2x512xf32> to vector<1x2x512xf32>
    %75 = vector.shape_cast %74 : vector<1x2x512xf32> to vector<2x512xf32>
    %76 = arith.truncf %73 : vector<2x128xf32> to vector<2x128xbf16>
    %c0_20 = arith.constant 0 : index
    %c0_21 = arith.constant 0 : index
    %77 = vector.load %arg2[%c0_20, %c0_21] : memref<128x512xbf16, #tpu.memory_space<vmem>>, vector<128x512xbf16>
    %cst_22 = arith.constant dense<0.000000e+00> : vector<2x512xf32>
    %78 = tpu.matmul %76, %77, %cst_22 {dimension_numbers = #tpu.dot_dimension_numbers<[1], [0], [0], [1], [0, 0, 1, 1], [], []>} : vector<2x128xbf16>, vector<128x512xbf16>, vector<2x512xf32> -> vector<2x512xf32>
    %79 = arith.addf %75, %78 : vector<2x512xf32>
    %80 = math.tanh %79 : vector<2x512xf32>
    %81 = vector.broadcast %10 : vector<1x512xf32> to vector<2x512xf32>
    %82 = arith.mulf %80, %81 : vector<2x512xf32>
    %83 = vector.broadcast %11 : vector<1x512xf32> to vector<2x512xf32>
    %84 = arith.addf %82, %83 : vector<2x512xf32>
    %85 = vector.extract_strided_slice %84 {offsets = [0, 0], sizes = [2, 128], strides = [1, 1]} : vector<2x512xf32> to vector<2x128xf32>
    %86 = vector.extract_strided_slice %84 {offsets = [0, 128], sizes = [2, 128], strides = [1, 1]} : vector<2x512xf32> to vector<2x128xf32>
    %87 = vector.extract_strided_slice %84 {offsets = [0, 256], sizes = [2, 128], strides = [1, 1]} : vector<2x512xf32> to vector<2x128xf32>
    %88 = vector.extract_strided_slice %84 {offsets = [0, 384], sizes = [2, 128], strides = [1, 1]} : vector<2x512xf32> to vector<2x128xf32>
    %89 = arith.mulf %86, %71 : vector<2x128xf32>
    %90 = arith.mulf %85, %87 : vector<2x128xf32>
    %91 = arith.addf %89, %90 : vector<2x128xf32>
    %92 = math.tanh %91 : vector<2x128xf32>
    %93 = arith.mulf %88, %92 : vector<2x128xf32>
    %94 = vector.extract_strided_slice %9 {offsets = [4, 0, 0], sizes = [1, 2, 512], strides = [1, 1, 1]} : vector<8x2x512xf32> to vector<1x2x512xf32>
    %95 = vector.shape_cast %94 : vector<1x2x512xf32> to vector<2x512xf32>
    %96 = arith.truncf %93 : vector<2x128xf32> to vector<2x128xbf16>
    %c0_23 = arith.constant 0 : index
    %c0_24 = arith.constant 0 : index
    %97 = vector.load %arg2[%c0_23, %c0_24] : memref<128x512xbf16, #tpu.memory_space<vmem>>, vector<128x512xbf16>
    %cst_25 = arith.constant dense<0.000000e+00> : vector<2x512xf32>
    %98 = tpu.matmul %96, %97, %cst_25 {dimension_numbers = #tpu.dot_dimension_numbers<[1], [0], [0], [1], [0, 0, 1, 1], [], []>} : vector<2x128xbf16>, vector<128x512xbf16>, vector<2x512xf32> -> vector<2x512xf32>
    %99 = arith.addf %95, %98 : vector<2x512xf32>
    %100 = math.tanh %99 : vector<2x512xf32>
    %101 = vector.broadcast %10 : vector<1x512xf32> to vector<2x512xf32>
    %102 = arith.mulf %100, %101 : vector<2x512xf32>
    %103 = vector.broadcast %11 : vector<1x512xf32> to vector<2x512xf32>
    %104 = arith.addf %102, %103 : vector<2x512xf32>
    %105 = vector.extract_strided_slice %104 {offsets = [0, 0], sizes = [2, 128], strides = [1, 1]} : vector<2x512xf32> to vector<2x128xf32>
    %106 = vector.extract_strided_slice %104 {offsets = [0, 128], sizes = [2, 128], strides = [1, 1]} : vector<2x512xf32> to vector<2x128xf32>
    %107 = vector.extract_strided_slice %104 {offsets = [0, 256], sizes = [2, 128], strides = [1, 1]} : vector<2x512xf32> to vector<2x128xf32>
    %108 = vector.extract_strided_slice %104 {offsets = [0, 384], sizes = [2, 128], strides = [1, 1]} : vector<2x512xf32> to vector<2x128xf32>
    %109 = arith.mulf %106, %91 : vector<2x128xf32>
    %110 = arith.mulf %105, %107 : vector<2x128xf32>
    %111 = arith.addf %109, %110 : vector<2x128xf32>
    %112 = math.tanh %111 : vector<2x128xf32>
    %113 = arith.mulf %108, %112 : vector<2x128xf32>
    %114 = vector.extract_strided_slice %9 {offsets = [5, 0, 0], sizes = [1, 2, 512], strides = [1, 1, 1]} : vector<8x2x512xf32> to vector<1x2x512xf32>
    %115 = vector.shape_cast %114 : vector<1x2x512xf32> to vector<2x512xf32>
    %116 = arith.truncf %113 : vector<2x128xf32> to vector<2x128xbf16>
    %c0_26 = arith.constant 0 : index
    %c0_27 = arith.constant 0 : index
    %117 = vector.load %arg2[%c0_26, %c0_27] : memref<128x512xbf16, #tpu.memory_space<vmem>>, vector<128x512xbf16>
    %cst_28 = arith.constant dense<0.000000e+00> : vector<2x512xf32>
    %118 = tpu.matmul %116, %117, %cst_28 {dimension_numbers = #tpu.dot_dimension_numbers<[1], [0], [0], [1], [0, 0, 1, 1], [], []>} : vector<2x128xbf16>, vector<128x512xbf16>, vector<2x512xf32> -> vector<2x512xf32>
    %119 = arith.addf %115, %118 : vector<2x512xf32>
    %120 = math.tanh %119 : vector<2x512xf32>
    %121 = vector.broadcast %10 : vector<1x512xf32> to vector<2x512xf32>
    %122 = arith.mulf %120, %121 : vector<2x512xf32>
    %123 = vector.broadcast %11 : vector<1x512xf32> to vector<2x512xf32>
    %124 = arith.addf %122, %123 : vector<2x512xf32>
    %125 = vector.extract_strided_slice %124 {offsets = [0, 0], sizes = [2, 128], strides = [1, 1]} : vector<2x512xf32> to vector<2x128xf32>
    %126 = vector.extract_strided_slice %124 {offsets = [0, 128], sizes = [2, 128], strides = [1, 1]} : vector<2x512xf32> to vector<2x128xf32>
    %127 = vector.extract_strided_slice %124 {offsets = [0, 256], sizes = [2, 128], strides = [1, 1]} : vector<2x512xf32> to vector<2x128xf32>
    %128 = vector.extract_strided_slice %124 {offsets = [0, 384], sizes = [2, 128], strides = [1, 1]} : vector<2x512xf32> to vector<2x128xf32>
    %129 = arith.mulf %126, %111 : vector<2x128xf32>
    %130 = arith.mulf %125, %127 : vector<2x128xf32>
    %131 = arith.addf %129, %130 : vector<2x128xf32>
    %132 = math.tanh %131 : vector<2x128xf32>
    %133 = arith.mulf %128, %132 : vector<2x128xf32>
    %134 = vector.extract_strided_slice %9 {offsets = [6, 0, 0], sizes = [1, 2, 512], strides = [1, 1, 1]} : vector<8x2x512xf32> to vector<1x2x512xf32>
    %135 = vector.shape_cast %134 : vector<1x2x512xf32> to vector<2x512xf32>
    %136 = arith.truncf %133 : vector<2x128xf32> to vector<2x128xbf16>
    %c0_29 = arith.constant 0 : index
    %c0_30 = arith.constant 0 : index
    %137 = vector.load %arg2[%c0_29, %c0_30] : memref<128x512xbf16, #tpu.memory_space<vmem>>, vector<128x512xbf16>
    %cst_31 = arith.constant dense<0.000000e+00> : vector<2x512xf32>
    %138 = tpu.matmul %136, %137, %cst_31 {dimension_numbers = #tpu.dot_dimension_numbers<[1], [0], [0], [1], [0, 0, 1, 1], [], []>} : vector<2x128xbf16>, vector<128x512xbf16>, vector<2x512xf32> -> vector<2x512xf32>
    %139 = arith.addf %135, %138 : vector<2x512xf32>
    %140 = math.tanh %139 : vector<2x512xf32>
    %141 = vector.broadcast %10 : vector<1x512xf32> to vector<2x512xf32>
    %142 = arith.mulf %140, %141 : vector<2x512xf32>
    %143 = vector.broadcast %11 : vector<1x512xf32> to vector<2x512xf32>
    %144 = arith.addf %142, %143 : vector<2x512xf32>
    %145 = vector.extract_strided_slice %144 {offsets = [0, 0], sizes = [2, 128], strides = [1, 1]} : vector<2x512xf32> to vector<2x128xf32>
    %146 = vector.extract_strided_slice %144 {offsets = [0, 128], sizes = [2, 128], strides = [1, 1]} : vector<2x512xf32> to vector<2x128xf32>
    %147 = vector.extract_strided_slice %144 {offsets = [0, 256], sizes = [2, 128], strides = [1, 1]} : vector<2x512xf32> to vector<2x128xf32>
    %148 = vector.extract_strided_slice %144 {offsets = [0, 384], sizes = [2, 128], strides = [1, 1]} : vector<2x512xf32> to vector<2x128xf32>
    %149 = arith.mulf %146, %131 : vector<2x128xf32>
    %150 = arith.mulf %145, %147 : vector<2x128xf32>
    %151 = arith.addf %149, %150 : vector<2x128xf32>
    %152 = math.tanh %151 : vector<2x128xf32>
    %153 = arith.mulf %148, %152 : vector<2x128xf32>
    %154 = vector.extract_strided_slice %9 {offsets = [7, 0, 0], sizes = [1, 2, 512], strides = [1, 1, 1]} : vector<8x2x512xf32> to vector<1x2x512xf32>
    %155 = vector.shape_cast %154 : vector<1x2x512xf32> to vector<2x512xf32>
    %156 = arith.truncf %153 : vector<2x128xf32> to vector<2x128xbf16>
    %c0_32 = arith.constant 0 : index
    %c0_33 = arith.constant 0 : index
    %157 = vector.load %arg2[%c0_32, %c0_33] : memref<128x512xbf16, #tpu.memory_space<vmem>>, vector<128x512xbf16>
    %cst_34 = arith.constant dense<0.000000e+00> : vector<2x512xf32>
    %158 = tpu.matmul %156, %157, %cst_34 {dimension_numbers = #tpu.dot_dimension_numbers<[1], [0], [0], [1], [0, 0, 1, 1], [], []>} : vector<2x128xbf16>, vector<128x512xbf16>, vector<2x512xf32> -> vector<2x512xf32>
    %159 = arith.addf %155, %158 : vector<2x512xf32>
    %160 = math.tanh %159 : vector<2x512xf32>
    %161 = vector.broadcast %10 : vector<1x512xf32> to vector<2x512xf32>
    %162 = arith.mulf %160, %161 : vector<2x512xf32>
    %163 = vector.broadcast %11 : vector<1x512xf32> to vector<2x512xf32>
    %164 = arith.addf %162, %163 : vector<2x512xf32>
    %165 = vector.extract_strided_slice %164 {offsets = [0, 0], sizes = [2, 128], strides = [1, 1]} : vector<2x512xf32> to vector<2x128xf32>
    %166 = vector.extract_strided_slice %164 {offsets = [0, 128], sizes = [2, 128], strides = [1, 1]} : vector<2x512xf32> to vector<2x128xf32>
    %167 = vector.extract_strided_slice %164 {offsets = [0, 256], sizes = [2, 128], strides = [1, 1]} : vector<2x512xf32> to vector<2x128xf32>
    %168 = vector.extract_strided_slice %164 {offsets = [0, 384], sizes = [2, 128], strides = [1, 1]} : vector<2x512xf32> to vector<2x128xf32>
    %169 = arith.mulf %166, %151 : vector<2x128xf32>
    %170 = arith.mulf %165, %167 : vector<2x128xf32>
    %171 = arith.addf %169, %170 : vector<2x128xf32>
    %172 = math.tanh %171 : vector<2x128xf32>
    %173 = arith.mulf %168, %172 : vector<2x128xf32>
    %c0_35 = arith.constant 0 : index
    %c0_36 = arith.constant 0 : index
    %174 = vector.load %arg6[%c0_35, %c0_36] : memref<1x128xf32, #tpu.memory_space<vmem>>, vector<1x128xf32>
    %175 = vector.broadcast %174 : vector<1x128xf32> to vector<2x128xf32>
    %176 = arith.mulf %173, %175 : vector<2x128xf32>
    %cst_37 = arith.constant dense<0.000000e+00> : vector<2xf32>
    %177 = vector.multi_reduction <add>, %176, %cst_37 [1] : vector<2x128xf32> to vector<2xf32>
    %178 = vector.shape_cast %177 : vector<2xf32> to vector<2x1xf32>
    %c0_38 = arith.constant 0 : index
    %c0_39 = arith.constant 0 : index
    %179 = vector.load %arg7[%c0_38, %c0_39] : memref<1x1xf32, #tpu.memory_space<vmem>>, vector<1x1xf32>
    %180 = vector.broadcast %179 : vector<1x1xf32> to vector<2x1xf32>
    %181 = arith.addf %178, %180 : vector<2x1xf32>
    %c0_40 = arith.constant 0 : index
    %c0_41 = arith.constant 0 : index
    %182 = vector.load %arg8[%c0_40, %c0_41] : memref<2x1xf32, #tpu.memory_space<vmem>>, vector<2x1xf32>
    tpu.vector_store %arg8[%c0_40, %c0_41], %181 {strides = array<i32>} : memref<2x1xf32, #tpu.memory_space<vmem>>, vector<2x1xf32>,
    return
  }
}

</mosaic_0001>

<llo_original>
// kernel: tpu_custom_call.1
$region0: #{tpu_custom_call.1}
  #allocation0 [shape = 'u32[]', space=smem, size = 0x4, offset = 0x4, fixed_abs, tag = 'smem constant byte address 0x4 - core index']
  #allocation1 [shape = 'u32[144,128]{1,0:T(1,128)}', space=vmem, size = 0x12000, scoped, tag = 'internal scratch']
  #allocation2 [shape = 'f32[1,1]{1,0:T(1,128)S(1)}', space=vmem, size = 0x200, scoped, tag = 'scoped memory for tpu_custom_call.1']
  %s0 = inlined_call_operand.vmem [shape: f32[8,2,1], index: 0, kind: input, shape index: {}]
  %s1 = inlined_call_operand.vmem [shape: f32[1,512], index: 1, kind: input, shape index: {}]
  %s2 = inlined_call_operand.hbm [shape: bf16[128,512], index: 2, kind: input, shape index: {}]
  %s3 = inlined_call_operand.vmem [shape: f32[1,512], index: 3, kind: input, shape index: {}]
  %s4 = inlined_call_operand.vmem [shape: f32[1,512], index: 4, kind: input, shape index: {}]
  %s5 = inlined_call_operand.vmem [shape: f32[1,512], index: 5, kind: input, shape index: {}]
  %s6 = inlined_call_operand.vmem [shape: f32[1,128], index: 6, kind: input, shape index: {}]
  %s7 = inlined_call_operand.<no memory space> [shape: f32[1,1], index: 7, kind: input, shape index: {}]
  %s8 = inlined_call_operand.vmem [shape: f32[2,1], index: 8, kind: output, shape index: {}]
  %s9 = sld [smem:[#allocation0]]
  $region46: #{tpu_custom_call.1} parent=0
    _
  %s11 = ssub.s32 1, %s9
  %s12 = scalar_select 0, %s11, %s9
  %v13 = vstv %s7
  %14 = vst [vmem:[#allocation2] sm:$0x1] %v13
  $region1: #{tpu_custom_call.1} parent=0
    #allocation3 [shape = 'u8[131072]{0}', space=vmem, size = 0x20000, scoped, tag = 'input window, operand 2, single buffered']
    #allocation4 [shape = 's32[1]{0}', space=sflag, size = 0x4, scoped, tag = 'scoped memory for tpu_custom_call.1']
    %15 = vsyncpa [#allocation4], 0
    // Predicated region
    $region2: #{tpu_custom_call.1} parent=1 // pred_check
      _
    $region3: #{tpu_custom_call.1} parent=1 // pred_check_branch
      %17 = sbr.rel (0) target = $region5
    $region4: #{tpu_custom_call.1} parent=1 // pred_region
      _
    $region5: #{tpu_custom_call.1} parent=1 // pred_fallthru
      _
    // Predicated region
    $region6: #{tpu_custom_call.1} parent=1 // pred_check
      _
    $region7: #{tpu_custom_call.1} parent=1 // pred_check_branch
      %19 = sbr.rel (0) target = $region9
    $region8: #{tpu_custom_call.1} parent=1 // pred_region
      _
    $region9: #{tpu_custom_call.1} parent=1 // pred_fallthru
      _
    // Predicated region
    $region10: #{tpu_custom_call.1} parent=1 // pred_check
      _
    $region11: #{tpu_custom_call.1} parent=1 // pred_check_branch
      %21 = sbr.rel (0) target = $region13
    $region12: #{tpu_custom_call.1} parent=1 // pred_region
      %s23 = ssub.s32 4096, 4096
      %24 = vsyncadd [#allocation4], %s23
      %s25 = sshll.u32 [#allocation3], 4
      %s26 = int_to_ptr.vmem [resolvable:$true] %s25
      %31 = dma.hbm_to_vmem [thread:$0]  %s2, 4096, %s26, [#allocation4], 256, 256, 16
    $region13: #{tpu_custom_call.1} parent=1 // pred_fallthru
      _
    // Predicated region
    $region14: #{tpu_custom_call.1} parent=1 // pred_check
      _
    $region15: #{tpu_custom_call.1} parent=1 // pred_check_branch
      %33 = sbr.rel (0) target = $region17
    $region16: #{tpu_custom_call.1} parent=1 // pred_region
      _
    $region17: #{tpu_custom_call.1} parent=1 // pred_fallthru
      _
    // Predicated region
    $region18: #{tpu_custom_call.1} parent=1 // pred_check
      _
    $region19: #{tpu_custom_call.1} parent=1 // pred_check_branch
      %35 = sbr.rel (0) target = $region21
    $region20: #{tpu_custom_call.1} parent=1 // pred_region
      _
    $region21: #{tpu_custom_call.1} parent=1 // pred_fallthru
      _
    // Predicated region
    $region22: #{tpu_custom_call.1} parent=1 // pred_check
      _
    $region23: #{tpu_custom_call.1} parent=1 // pred_check_branch
      %37 = sbr.rel (0) target = $region25
    $region24: #{tpu_custom_call.1} parent=1 // pred_region
      _
    $region25: #{tpu_custom_call.1} parent=1 // pred_fallthru
      _
    // Predicated region
    $region26: #{tpu_custom_call.1} parent=1 // pred_check
      _
    $region27: #{tpu_custom_call.1} parent=1 // pred_check_branch
      %39 = sbr.rel (0) target = $region29
    $region28: #{tpu_custom_call.1} parent=1 // pred_region
      _
    $region29: #{tpu_custom_call.1} parent=1 // pred_fallthru
      _
    // Predicated region
    $region30: #{tpu_custom_call.1} parent=1 // pred_check
      _
    $region31: #{tpu_custom_call.1} parent=1 // pred_check_branch
      %41 = sbr.rel (0) target = $region33
    $region32: #{tpu_custom_call.1} parent=1 // pred_region
      _
    $region33: #{tpu_custom_call.1} parent=1 // pred_fallthru
      _
    // Predicated region
    $region34: #{tpu_custom_call.1} parent=1 // pred_check
      _
    $region35: #{tpu_custom_call.1} parent=1 // pred_check_branch
      %43 = sbr.rel (0) target = $region37
    $region36: #{tpu_custom_call.1} parent=1 // pred_region
      %44 = dma.done [#allocation4], 4096
    $region37: #{tpu_custom_call.1} parent=1 // pred_fallthru
      _
    %v46 = vld [vmem:[%s0] sm:$0x3]
    %v47 = vld [vmem:[%s0 + $0x2] sm:$0x3]
    %v48 = vld [vmem:[%s0 + $0x4] sm:$0x3]
    %v49 = vld [vmem:[%s0 + $0x6] sm:$0x3]
    %v50 = vld [vmem:[%s0 + $0x8] sm:$0x3]
    %v51 = vld [vmem:[%s0 + $0xa] sm:$0x3]
    %v52 = vld [vmem:[%s0 + $0xc] sm:$0x3]
    %v53 = vld [vmem:[%s0 + $0xe] sm:$0x3]
    %v54 = vld [vmem:[%s1] sm:$0xf]
    %v55 = vld [vmem:[%s3] sm:$0xf]
    %57 = vset.pattern.permute.xlu0 0
    %58 = vperm.xlu0 %57, %v46
    %v59 = vpop.permute.xlu0 %58
    %62 = vset.pattern.permute.xlu0 0
    %63 = vperm.xlu0 %62, %v47
    %v64 = vpop.permute.xlu0 %63
    %67 = vset.pattern.permute.xlu0 0
    %68 = vperm.xlu0 %67, %v48
    %v69 = vpop.permute.xlu0 %68
    %72 = vset.pattern.permute.xlu0 0
    %73 = vperm.xlu0 %72, %v49
    %v74 = vpop.permute.xlu0 %73
    %77 = vset.pattern.permute.xlu0 0
    %78 = vperm.xlu0 %77, %v50
    %v79 = vpop.permute.xlu0 %78
    %82 = vset.pattern.permute.xlu0 0
    %83 = vperm.xlu0 %82, %v51
    %v84 = vpop.permute.xlu0 %83
    %87 = vset.pattern.permute.xlu0 0
    %88 = vperm.xlu0 %87, %v52
    %v89 = vpop.permute.xlu0 %88
    %92 = vset.pattern.permute.xlu0 0
    %93 = vperm.xlu0 %92, %v53
    %v94 = vpop.permute.xlu0 %93
    %v97 = vlaneseq
    %v98 = vshrl.u32 %v97, 7
    %v99 = vsub.s32 0, %v98
    %v100 = vrot.slane %v54, %v99
    %v101 = vlaneseq
    %v102 = vshrl.u32 %v101, 7
    %v103 = vsub.s32 1, %v102
    %v104 = vrot.slane %v54, %v103
    %v105 = vlaneseq
    %v106 = vshrl.u32 %v105, 7
    %v107 = vsub.s32 2, %v106
    %v108 = vrot.slane %v54, %v107
    %v109 = vlaneseq
    %v110 = vshrl.u32 %v109, 7
    %v111 = vsub.s32 3, %v110
    %v112 = vrot.slane %v54, %v111
    %v117 = vmul.f32 %v59, %v100
    %v118 = vmul.f32 %v59, %v104
    %v119 = vmul.f32 %v59, %v108
    %v120 = vmul.f32 %v59, %v112
    %v121 = vmul.f32 %v64, %v100
    %v122 = vmul.f32 %v64, %v104
    %v123 = vmul.f32 %v64, %v108
    %v124 = vmul.f32 %v64, %v112
    %v125 = vmul.f32 %v69, %v100
    %v126 = vmul.f32 %v69, %v104
    %v127 = vmul.f32 %v69, %v108
    %v128 = vmul.f32 %v69, %v112
    %v129 = vmul.f32 %v74, %v100
    %v130 = vmul.f32 %v74, %v104
    %v131 = vmul.f32 %v74, %v108
    %v132 = vmul.f32 %v74, %v112
    %v133 = vmul.f32 %v79, %v100
    %v134 = vmul.f32 %v79, %v104
    %v135 = vmul.f32 %v79, %v108
    %v136 = vmul.f32 %v79, %v112
    %v137 = vmul.f32 %v84, %v100
    %v138 = vmul.f32 %v84, %v104
    %v139 = vmul.f32 %v84, %v108
    %v140 = vmul.f32 %v84, %v112
    %v141 = vmul.f32 %v89, %v100
    %v142 = vmul.f32 %v89, %v104
    %v143 = vmul.f32 %v89, %v108
    %v144 = vmul.f32 %v89, %v112
    %v145 = vmul.f32 %v94, %v100
    %v146 = vmul.f32 %v94, %v104
    %v147 = vmul.f32 %v94, %v108
    %v148 = vmul.f32 %v94, %v112
    %v150 = vlaneseq
    %v151 = vshrl.u32 %v150, 7
    %v152 = vsub.s32 0, %v151
    %v153 = vrot.slane %v55, %v152
    %v154 = vlaneseq
    %v155 = vshrl.u32 %v154, 7
    %v156 = vsub.s32 1, %v155
    %v157 = vrot.slane %v55, %v156
    %v158 = vlaneseq
    %v159 = vshrl.u32 %v158, 7
    %v160 = vsub.s32 2, %v159
    %v161 = vrot.slane %v55, %v160
    %v162 = vlaneseq
    %v163 = vshrl.u32 %v162, 7
    %v164 = vsub.s32 3, %v163
    %v165 = vrot.slane %v55, %v164
    %v170 = vadd.f32 %v117, %v153
    %v171 = vadd.f32 %v118, %v157
    %v172 = vadd.f32 %v119, %v161
    %v173 = vadd.f32 %v120, %v165
    %v174 = vadd.f32 %v121, %v153
    %v175 = vadd.f32 %v122, %v157
    %v176 = vadd.f32 %v123, %v161
    %v177 = vadd.f32 %v124, %v165
    %v178 = vadd.f32 %v125, %v153
    %v179 = vadd.f32 %v126, %v157
    %v180 = vadd.f32 %v127, %v161
    %v181 = vadd.f32 %v128, %v165
    %v182 = vadd.f32 %v129, %v153
    %v183 = vadd.f32 %v130, %v157
    %v184 = vadd.f32 %v131, %v161
    %v185 = vadd.f32 %v132, %v165
    %v186 = vadd.f32 %v133, %v153
    %v187 = vadd.f32 %v134, %v157
    %v188 = vadd.f32 %v135, %v161
    %v189 = vadd.f32 %v136, %v165
    %v190 = vadd.f32 %v137, %v153
    %v191 = vadd.f32 %v138, %v157
    %v192 = vadd.f32 %v139, %v161
    %v193 = vadd.f32 %v140, %v165
    %v194 = vadd.f32 %v141, %v153
    %v195 = vadd.f32 %v142, %v157
    %v196 = vadd.f32 %v143, %v161
    %v197 = vadd.f32 %v144, %v165
    %v198 = vadd.f32 %v145, %v153
    %v199 = vadd.f32 %v146, %v157
    %v200 = vadd.f32 %v147, %v161
    %v201 = vadd.f32 %v148, %v165
    %v202 = vld [vmem:[%s4] sm:$0xf]
    %v203 = vld [vmem:[%s5] sm:$0xf]
    %v204 = vld [vmem:[#allocation3] sm:$0xff]
    %v205 = vld [vmem:[#allocation3 + $0x8] sm:$0xff]
    %v206 = vld [vmem:[#allocation3 + $0x10] sm:$0xff]
    %v207 = vld [vmem:[#allocation3 + $0x18] sm:$0xff]
    %v208 = vld [vmem:[#allocation3 + $0x20] sm:$0xff]
    %v209 = vld [vmem:[#allocation3 + $0x28] sm:$0xff]
    %v210 = vld [vmem:[#allocation3 + $0x30] sm:$0xff]
    %v211 = vld [vmem:[#allocation3 + $0x38] sm:$0xff]
    %v212 = vld [vmem:[#allocation3 + $0x40] sm:$0xff]
    %v213 = vld [vmem:[#allocation3 + $0x48] sm:$0xff]
    %v214 = vld [vmem:[#allocation3 + $0x50] sm:$0xff]
    %v215 = vld [vmem:[#allocation3 + $0x58] sm:$0xff]
    %v216 = vld [vmem:[#allocation3 + $0x60] sm:$0xff]
    %v217 = vld [vmem:[#allocation3 + $0x68] sm:$0xff]
    %v218 = vld [vmem:[#allocation3 + $0x70] sm:$0xff]
    %v219 = vld [vmem:[#allocation3 + $0x78] sm:$0xff]
    %v220 = vld [vmem:[#allocation3 + $0x80] sm:$0xff]
    %v221 = vld [vmem:[#allocation3 + $0x88] sm:$0xff]
    %v222 = vld [vmem:[#allocation3 + $0x90] sm:$0xff]
    %v223 = vld [vmem:[#allocation3 + $0x98] sm:$0xff]
    %v224 = vld [vmem:[#allocation3 + $0xa0] sm:$0xff]
    %v225 = vld [vmem:[#allocation3 + $0xa8] sm:$0xff]
    %v226 = vld [vmem:[#allocation3 + $0xb0] sm:$0xff]
    %v227 = vld [vmem:[#allocation3 + $0xb8] sm:$0xff]
    %v228 = vld [vmem:[#allocation3 + $0xc0] sm:$0xff]
    %v229 = vld [vmem:[#allocation3 + $0xc8] sm:$0xff]
    %v230 = vld [vmem:[#allocation3 + $0xd0] sm:$0xff]
    %v231 = vld [vmem:[#allocation3 + $0xd8] sm:$0xff]
    %v232 = vld [vmem:[#allocation3 + $0xe0] sm:$0xff]
    %v233 = vld [vmem:[#allocation3 + $0xe8] sm:$0xff]
    %v234 = vld [vmem:[#allocation3 + $0xf0] sm:$0xff]
    %v235 = vld [vmem:[#allocation3 + $0xf8] sm:$0xff]
    %v268 = vunpack.c.l.b16 %v204
    %v269 = vunpack.c.h.b16 %v204
    %v270 = vunpack.c.l.b16 %v205
    %v271 = vunpack.c.h.b16 %v205
    %v272 = vunpack.c.l.b16 %v206
    %v273 = vunpack.c.h.b16 %v206
    %v274 = vunpack.c.l.b16 %v207
    %v275 = vunpack.c.h.b16 %v207
    %v276 = vunpack.c.l.b16 %v208
    %v277 = vunpack.c.h.b16 %v208
    %v278 = vunpack.c.l.b16 %v209
    %v279 = vunpack.c.h.b16 %v209
    %v280 = vunpack.c.l.b16 %v210
    %v281 = vunpack.c.h.b16 %v210
    %v282 = vunpack.c.l.b16 %v211
    %v283 = vunpack.c.h.b16 %v211
    %v284 = vunpack.c.l.b16 %v212
    %v285 = vunpack.c.h.b16 %v212
    %v286 = vunpack.c.l.b16 %v213
    %v287 = vunpack.c.h.b16 %v213
    %v288 = vunpack.c.l.b16 %v214
    %v289 = vunpack.c.h.b16 %v214
    %v290 = vunpack.c.l.b16 %v215
    %v291 = vunpack.c.h.b16 %v215
    %v292 = vunpack.c.l.b16 %v216
    %v293 = vunpack.c.h.b16 %v216
    %v294 = vunpack.c.l.b16 %v217
    %v295 = vunpack.c.h.b16 %v217
    %v296 = vunpack.c.l.b16 %v218
    %v297 = vunpack.c.h.b16 %v218
    %v298 = vunpack.c.l.b16 %v219
    %v299 = vunpack.c.h.b16 %v219
    %v300 = vunpack.c.l.b16 %v220
    %v301 = vunpack.c.h.b16 %v220
    %v302 = vunpack.c.l.b16 %v221
    %v303 = vunpack.c.h.b16 %v221
    %v304 = vunpack.c.l.b16 %v222
    %v305 = vunpack.c.h.b16 %v222
    %v306 = vunpack.c.l.b16 %v223
    %v307 = vunpack.c.h.b16 %v223
    %v308 = vunpack.c.l.b16 %v224
    %v309 = vunpack.c.h.b16 %v224
    %v310 = vunpack.c.l.b16 %v225
    %v311 = vunpack.c.h.b16 %v225
    %v312 = vunpack.c.l.b16 %v226
    %v313 = vunpack.c.h.b16 %v226
    %v314 = vunpack.c.l.b16 %v227
    %v315 = vunpack.c.h.b16 %v227
    %v316 = vunpack.c.l.b16 %v228
    %v317 = vunpack.c.h.b16 %v228
    %v318 = vunpack.c.l.b16 %v229
    %v319 = vunpack.c.h.b16 %v229
    %v320 = vunpack.c.l.b16 %v230
    %v321 = vunpack.c.h.b16 %v230
    %v322 = vunpack.c.l.b16 %v231
    %v323 = vunpack.c.h.b16 %v231
    %v324 = vunpack.c.l.b16 %v232
    %v325 = vunpack.c.h.b16 %v232
    %v326 = vunpack.c.l.b16 %v233
    %v327 = vunpack.c.h.b16 %v233
    %v328 = vunpack.c.l.b16 %v234
    %v329 = vunpack.c.h.b16 %v234
    %v330 = vunpack.c.l.b16 %v235
    %v331 = vunpack.c.h.b16 %v235
    %v332 = vpack.c.b16 %v272, %v268
    %v333 = vpack.c.b16 %v273, %v269
    %v334 = vpack.c.b16 %v274, %v270
    %v335 = vpack.c.b16 %v275, %v271
    %v336 = vpack.c.b16 %v280, %v276
    %v337 = vpack.c.b16 %v281, %v277
    %v338 = vpack.c.b16 %v282, %v278
    %v339 = vpack.c.b16 %v283, %v279
    %v340 = vpack.c.b16 %v288, %v284
    %v341 = vpack.c.b16 %v289, %v285
    %v342 = vpack.c.b16 %v290, %v286
    %v343 = vpack.c.b16 %v291, %v287
    %v344 = vpack.c.b16 %v296, %v292
    %v345 = vpack.c.b16 %v297, %v293
    %v346 = vpack.c.b16 %v298, %v294
    %v347 = vpack.c.b16 %v299, %v295
    %v348 = vpack.c.b16 %v304, %v300
    %v349 = vpack.c.b16 %v305, %v301
    %v350 = vpack.c.b16 %v306, %v302
    %v351 = vpack.c.b16 %v307, %v303
    %v352 = vpack.c.b16 %v312, %v308
    %v353 = vpack.c.b16 %v313, %v309
    %v354 = vpack.c.b16 %v314, %v310
    %v355 = vpack.c.b16 %v315, %v311
    %v356 = vpack.c.b16 %v320, %v316
    %v357 = vpack.c.b16 %v321, %v317
    %v358 = vpack.c.b16 %v322, %v318
    %v359 = vpack.c.b16 %v323, %v319
    %v360 = vpack.c.b16 %v328, %v324
    %v361 = vpack.c.b16 %v329, %v325
    %v362 = vpack.c.b16 %v330, %v326
    %v363 = vpack.c.b16 %v331, %v327
    %396 = vmatprep.subr.bf16.mxu0 %v333
    %397 = vmatpush1.bf16.msra.mxu0 %v332
    %398 = vmatprep.subr.bf16.mxu0 %v337
    %399 = vmatpush1.bf16.msra.mxu0 %v336
    %400 = vmatprep.subr.bf16.mxu0 %v341
    %401 = vmatpush1.bf16.msra.mxu0 %v340
    %402 = vmatprep.subr.bf16.mxu0 %v345
    %403 = vmatpush1.bf16.msra.mxu0 %v344
    %404 = vmatprep.subr.bf16.mxu0 %v349
    %405 = vmatpush1.bf16.msra.mxu0 %v348
    %406 = vmatprep.subr.bf16.mxu0 %v353
    %407 = vmatpush1.bf16.msra.mxu0 %v352
    %408 = vmatprep.subr.bf16.mxu0 %v357
    %409 = vmatpush1.bf16.msra.mxu0 %v356
    %410 = vmatprep.subr.bf16.mxu0 %v361
    %411 = vmatpush1.bf16.msra.mxu0 %v360
    %412 = vmatprep.subr.bf16.mxu0 0
    %413 = vmatpush1.bf16.msra.mxu0 0
    %414 = vmatprep.subr.bf16.mxu0 0
    %415 = vmatpush1.bf16.msra.mxu0 0
    %416 = vmatprep.subr.bf16.mxu0 0
    %417 = vmatpush1.bf16.msra.mxu0 0
    %418 = vmatprep.subr.bf16.mxu0 0
    %419 = vmatpush1.bf16.msra.mxu0 0
    %420 = vmatprep.subr.bf16.mxu0 0
    %421 = vmatpush1.bf16.msra.mxu0 0
    %422 = vmatprep.subr.bf16.mxu0 0
    %423 = vmatpush1.bf16.msra.mxu0 0
    %424 = vmatprep.subr.bf16.mxu0 0
    %425 = vmatpush1.bf16.msra.mxu0 0
    %426 = vmatprep.subr.bf16.mxu0 0
    %427 = vmatpush1.bf16.msra.mxu0 0
    %428 = vmatprep.mubr.bf16.mxu0 0
    %429 = vmatmul.mubr.bf16.gmra.mrb[0].mxu0 0
    %v430 = vpop.f32.mrb[0].mxu0
    %v431 = vadd.f32 0.0, %v430
    %v432 = vpop.f32.mrb[0].mxu0
    %v433 = vadd.f32 0.0, %v432
    %v434 = vpop.f32.mrb[0].mxu0
    %v435 = vpop.f32.mrb[0].mxu0
    %436 = vdwg.mxu0
    %437 = vmatprep.subr.bf16.mxu0 %v335
    %438 = vmatpush1.bf16.msra.mxu0 %v334
    %439 = vmatprep.subr.bf16.mxu0 %v339
    %440 = vmatpush1.bf16.msra.mxu0 %v338
    %441 = vmatprep.subr.bf16.mxu0 %v343
    %442 = vmatpush1.bf16.msra.mxu0 %v342
    %443 = vmatprep.subr.bf16.mxu0 %v347
    %444 = vmatpush1.bf16.msra.mxu0 %v346
    %445 = vmatprep.subr.bf16.mxu0 %v351
    %446 = vmatpush1.bf16.msra.mxu0 %v350
    %447 = vmatprep.subr.bf16.mxu0 %v355
    %448 = vmatpush1.bf16.msra.mxu0 %v354
    %449 = vmatprep.subr.bf16.mxu0 %v359
    %450 = vmatpush1.bf16.msra.mxu0 %v358
    %451 = vmatprep.subr.bf16.mxu0 %v363
    %452 = vmatpush1.bf16.msra.mxu0 %v362
    %453 = vmatprep.subr.bf16.mxu0 0
    %454 = vmatpush1.bf16.msra.mxu0 0
    %455 = vmatprep.subr.bf16.mxu0 0
    %456 = vmatpush1.bf16.msra.mxu0 0
    %457 = vmatprep.subr.bf16.mxu0 0
    %458 = vmatpush1.bf16.msra.mxu0 0
    %459 = vmatprep.subr.bf16.mxu0 0
    %460 = vmatpush1.bf16.msra.mxu0 0
    %461 = vmatprep.subr.bf16.mxu0 0
    %462 = vmatpush1.bf16.msra.mxu0 0
    %463 = vmatprep.subr.bf16.mxu0 0
    %464 = vmatpush1.bf16.msra.mxu0 0
    %465 = vmatprep.subr.bf16.mxu0 0
    %466 = vmatpush1.bf16.msra.mxu0 0
    %467 = vmatprep.subr.bf16.mxu0 0
    %468 = vmatpush1.bf16.msra.mxu0 0
    %469 = vmatprep.mubr.bf16.mxu0 0
    %470 = vmatmul.mubr.bf16.gmra.mrb[0].mxu0 0
    %v471 = vpop.f32.mrb[0].mxu0
    %v472 = vadd.f32 0.0, %v471
    %v473 = vpop.f32.mrb[0].mxu0
    %v474 = vadd.f32 0.0, %v473
    %v475 = vpop.f32.mrb[0].mxu0
    %v476 = vpop.f32.mrb[0].mxu0
    %477 = vdwg.mxu0
    %v478 = vadd.f32 %v170, %v431
    %v479 = vadd.f32 %v171, %v433
    %v480 = vadd.f32 %v172, %v472
    %v481 = vadd.f32 %v173, %v474
    %v482 = vtanh.pop %v478
    %v483 = vtanh.pop %v479
    %v484 = vtanh.pop %v480
    %v485 = vtanh.pop %v481
    %v487 = vlaneseq
    %v488 = vshrl.u32 %v487, 7
    %v489 = vsub.s32 0, %v488
    %v490 = vrot.slane %v202, %v489
    %v491 = vlaneseq
    %v492 = vshrl.u32 %v491, 7
    %v493 = vsub.s32 1, %v492
    %v494 = vrot.slane %v202, %v493
    %v495 = vlaneseq
    %v496 = vshrl.u32 %v495, 7
    %v497 = vsub.s32 2, %v496
    %v498 = vrot.slane %v202, %v497
    %v499 = vlaneseq
    %v500 = vshrl.u32 %v499, 7
    %v501 = vsub.s32 3, %v500
    %v502 = vrot.slane %v202, %v501
    %v507 = vmul.f32 %v482, %v490
    %v508 = vmul.f32 %v483, %v494
    %v509 = vmul.f32 %v484, %v498
    %v510 = vmul.f32 %v485, %v502
    %v512 = vlaneseq
    %v513 = vshrl.u32 %v512, 7
    %v514 = vsub.s32 0, %v513
    %v515 = vrot.slane %v203, %v514
    %v516 = vlaneseq
    %v517 = vshrl.u32 %v516, 7
    %v518 = vsub.s32 1, %v517
    %v519 = vrot.slane %v203, %v518
    %v520 = vlaneseq
    %v521 = vshrl.u32 %v520, 7
    %v522 = vsub.s32 2, %v521
    %v523 = vrot.slane %v203, %v522
    %v524 = vlaneseq
    %v525 = vshrl.u32 %v524, 7
    %v526 = vsub.s32 3, %v525
    %v527 = vrot.slane %v203, %v526
    %v532 = vadd.f32 %v507, %v515
    %v533 = vadd.f32 %v508, %v519
    %v534 = vadd.f32 %v509, %v523
    %v535 = vadd.f32 %v510, %v527
    %v536 = vmul.f32 %v533, 0.0
    %v537 = vmul.f32 %v532, %v534
    %v538 = vadd.f32 %v536, %v537
    %v539 = vtanh.pop %v538
    %v540 = vmul.f32 %v535, %v539
    %v541 = vpack.c.bf16 %v540, %v540
    %542 = vmatprep.subr.bf16.mxu0 %v333
    %543 = vmatpush1.bf16.msra.mxu0 %v332
    %544 = vmatprep.subr.bf16.mxu0 %v337
    %545 = vmatpush1.bf16.msra.mxu0 %v336
    %546 = vmatprep.subr.bf16.mxu0 %v341
    %547 = vmatpush1.bf16.msra.mxu0 %v340
    %548 = vmatprep.subr.bf16.mxu0 %v345
    %549 = vmatpush1.bf16.msra.mxu0 %v344
    %550 = vmatprep.subr.bf16.mxu0 %v349
    %551 = vmatpush1.bf16.msra.mxu0 %v348
    %552 = vmatprep.subr.bf16.mxu0 %v353
    %553 = vmatpush1.bf16.msra.mxu0 %v352
    %554 = vmatprep.subr.bf16.mxu0 %v357
    %555 = vmatpush1.bf16.msra.mxu0 %v356
    %556 = vmatprep.subr.bf16.mxu0 %v361
    %557 = vmatpush1.bf16.msra.mxu0 %v360
    %558 = vmatprep.subr.bf16.mxu0 0
    %559 = vmatpush1.bf16.msra.mxu0 0
    %560 = vmatprep.subr.bf16.mxu0 0
    %561 = vmatpush1.bf16.msra.mxu0 0
    %562 = vmatprep.subr.bf16.mxu0 0
    %563 = vmatpush1.bf16.msra.mxu0 0
    %564 = vmatprep.subr.bf16.mxu0 0
    %565 = vmatpush1.bf16.msra.mxu0 0
    %566 = vmatprep.subr.bf16.mxu0 0
    %567 = vmatpush1.bf16.msra.mxu0 0
    %568 = vmatprep.subr.bf16.mxu0 0
    %569 = vmatpush1.bf16.msra.mxu0 0
    %570 = vmatprep.subr.bf16.mxu0 0
    %571 = vmatpush1.bf16.msra.mxu0 0
    %572 = vmatprep.subr.bf16.mxu0 0
    %573 = vmatpush1.bf16.msra.mxu0 0
    %574 = vmatprep.mubr.bf16.mxu0 0
    %575 = vmatmul.mubr.bf16.gmra.mrb[0].mxu0 %v541
    %v576 = vpop.f32.mrb[0].mxu0
    %v577 = vadd.f32 0.0, %v576
    %v578 = vpop.f32.mrb[0].mxu0
    %v579 = vadd.f32 0.0, %v578
    %v580 = vpop.f32.mrb[0].mxu0
    %v581 = vpop.f32.mrb[0].mxu0
    %582 = vdwg.mxu0
    %583 = vmatprep.subr.bf16.mxu0 %v335
    %584 = vmatpush1.bf16.msra.mxu0 %v334
    %585 = vmatprep.subr.bf16.mxu0 %v339
    %586 = vmatpush1.bf16.msra.mxu0 %v338
    %587 = vmatprep.subr.bf16.mxu0 %v343
    %588 = vmatpush1.bf16.msra.mxu0 %v342
    %589 = vmatprep.subr.bf16.mxu0 %v347
    %590 = vmatpush1.bf16.msra.mxu0 %v346
    %591 = vmatprep.subr.bf16.mxu0 %v351
    %592 = vmatpush1.bf16.msra.mxu0 %v350
    %593 = vmatprep.subr.bf16.mxu0 %v355
    %594 = vmatpush1.bf16.msra.mxu0 %v354
    %595 = vmatprep.subr.bf16.mxu0 %v359
    %596 = vmatpush1.bf16.msra.mxu0 %v358
    %597 = vmatprep.subr.bf16.mxu0 %v363
    %598 = vmatpush1.bf16.msra.mxu0 %v362
    %599 = vmatprep.subr.bf16.mxu0 0
    %600 = vmatpush1.bf16.msra.mxu0 0
    %601 = vmatprep.subr.bf16.mxu0 0
    %602 = vmatpush1.bf16.msra.mxu0 0
    %603 = vmatprep.subr.bf16.mxu0 0
    %604 = vmatpush1.bf16.msra.mxu0 0
    %605 = vmatprep.subr.bf16.mxu0 0
    %606 = vmatpush1.bf16.msra.mxu0 0
    %607 = vmatprep.subr.bf16.mxu0 0
    %608 = vmatpush1.bf16.msra.mxu0 0
    %609 = vmatprep.subr.bf16.mxu0 0
    %610 = vmatpush1.bf16.msra.mxu0 0
    %611 = vmatprep.subr.bf16.mxu0 0
    %612 = vmatpush1.bf16.msra.mxu0 0
    %613 = vmatprep.subr.bf16.mxu0 0
    %614 = vmatpush1.bf16.msra.mxu0 0
    %615 = vmatprep.mubr.bf16.mxu0 0
    %616 = vmatmul.mubr.bf16.gmra.mrb[0].mxu0 %v541
    %v617 = vpop.f32.mrb[0].mxu0
    %v618 = vadd.f32 0.0, %v617
    %v619 = vpop.f32.mrb[0].mxu0
    %v620 = vadd.f32 0.0, %v619
    %v621 = vpop.f32.mrb[0].mxu0
    %v622 = vpop.f32.mrb[0].mxu0
    %623 = vdwg.mxu0
    %v624 = vadd.f32 %v174, %v577
    %v625 = vadd.f32 %v175, %v579
    %v626 = vadd.f32 %v176, %v618
    %v627 = vadd.f32 %v177, %v620
    %v628 = vtanh.pop %v624
    %v629 = vtanh.pop %v625
    %v630 = vtanh.pop %v626
    %v631 = vtanh.pop %v627
    %v632 = vmul.f32 %v628, %v490
    %v633 = vmul.f32 %v629, %v494
    %v634 = vmul.f32 %v630, %v498
    %v635 = vmul.f32 %v631, %v502
    %v636 = vadd.f32 %v632, %v515
    %v637 = vadd.f32 %v633, %v519
    %v638 = vadd.f32 %v634, %v523
    %v639 = vadd.f32 %v635, %v527
    %v640 = vmul.f32 %v637, %v538
    %v641 = vmul.f32 %v636, %v638
    %v642 = vadd.f32 %v640, %v641
    %v643 = vtanh.pop %v642
    %v644 = vmul.f32 %v639, %v643
    %v645 = vpack.c.bf16 %v644, %v644
    %646 = vmatprep.subr.bf16.mxu0 %v333
    %647 = vmatpush1.bf16.msra.mxu0 %v332
    %648 = vmatprep.subr.bf16.mxu0 %v337
    %649 = vmatpush1.bf16.msra.mxu0 %v336
    %650 = vmatprep.subr.bf16.mxu0 %v341
    %651 = vmatpush1.bf16.msra.mxu0 %v340
    %652 = vmatprep.subr.bf16.mxu0 %v345
    %653 = vmatpush1.bf16.msra.mxu0 %v344
    %654 = vmatprep.subr.bf16.mxu0 %v349
    %655 = vmatpush1.bf16.msra.mxu0 %v348
    %656 = vmatprep.subr.bf16.mxu0 %v353
    %657 = vmatpush1.bf16.msra.mxu0 %v352
    %658 = vmatprep.subr.bf16.mxu0 %v357
    %659 = vmatpush1.bf16.msra.mxu0 %v356
    %660 = vmatprep.subr.bf16.mxu0 %v361
    %661 = vmatpush1.bf16.msra.mxu0 %v360
    %662 = vmatprep.subr.bf16.mxu0 0
    %663 = vmatpush1.bf16.msra.mxu0 0
    %664 = vmatprep.subr.bf16.mxu0 0
    %665 = vmatpush1.bf16.msra.mxu0 0
    %666 = vmatprep.subr.bf16.mxu0 0
    %667 = vmatpush1.bf16.msra.mxu0 0
    %668 = vmatprep.subr.bf16.mxu0 0
    %669 = vmatpush1.bf16.msra.mxu0 0
    %670 = vmatprep.subr.bf16.mxu0 0
    %671 = vmatpush1.bf16.msra.mxu0 0
    %672 = vmatprep.subr.bf16.mxu0 0
    %673 = vmatpush1.bf16.msra.mxu0 0
    %674 = vmatprep.subr.bf16.mxu0 0
    %675 = vmatpush1.bf16.msra.mxu0 0
    %676 = vmatprep.subr.bf16.mxu0 0
    %677 = vmatpush1.bf16.msra.mxu0 0
    %678 = vmatprep.mubr.bf16.mxu0 0
    %679 = vmatmul.mubr.bf16.gmra.mrb[0].mxu0 %v645
    %v680 = vpop.f32.mrb[0].mxu0
    %v681 = vadd.f32 0.0, %v680
    %v682 = vpop.f32.mrb[0].mxu0
    %v683 = vadd.f32 0.0, %v682
    %v684 = vpop.f32.mrb[0].mxu0
    %v685 = vpop.f32.mrb[0].mxu0
    %686 = vdwg.mxu0
    %687 = vmatprep.subr.bf16.mxu0 %v335
    %688 = vmatpush1.bf16.msra.mxu0 %v334
    %689 = vmatprep.subr.bf16.mxu0 %v339
    %690 = vmatpush1.bf16.msra.mxu0 %v338
    %691 = vmatprep.subr.bf16.mxu0 %v343
    %692 = vmatpush1.bf16.msra.mxu0 %v342
    %693 = vmatprep.subr.bf16.mxu0 %v347
    %694 = vmatpush1.bf16.msra.mxu0 %v346
    %695 = vmatprep.subr.bf16.mxu0 %v351
    %696 = vmatpush1.bf16.msra.mxu0 %v350
    %697 = vmatprep.subr.bf16.mxu0 %v355
    %698 = vmatpush1.bf16.msra.mxu0 %v354
    %699 = vmatprep.subr.bf16.mxu0 %v359
    %700 = vmatpush1.bf16.msra.mxu0 %v358
    %701 = vmatprep.subr.bf16.mxu0 %v363
    %702 = vmatpush1.bf16.msra.mxu0 %v362
    %703 = vmatprep.subr.bf16.mxu0 0
    %704 = vmatpush1.bf16.msra.mxu0 0
    %705 = vmatprep.subr.bf16.mxu0 0
    %706 = vmatpush1.bf16.msra.mxu0 0
    %707 = vmatprep.subr.bf16.mxu0 0
    %708 = vmatpush1.bf16.msra.mxu0 0
    %709 = vmatprep.subr.bf16.mxu0 0
    %710 = vmatpush1.bf16.msra.mxu0 0
    %711 = vmatprep.subr.bf16.mxu0 0
    %712 = vmatpush1.bf16.msra.mxu0 0
    %713 = vmatprep.subr.bf16.mxu0 0
    %714 = vmatpush1.bf16.msra.mxu0 0
    %715 = vmatprep.subr.bf16.mxu0 0
    %716 = vmatpush1.bf16.msra.mxu0 0
    %717 = vmatprep.subr.bf16.mxu0 0
    %718 = vmatpush1.bf16.msra.mxu0 0
    %719 = vmatprep.mubr.bf16.mxu0 0
    %720 = vmatmul.mubr.bf16.gmra.mrb[0].mxu0 %v645
    %v721 = vpop.f32.mrb[0].mxu0
    %v722 = vadd.f32 0.0, %v721
    %v723 = vpop.f32.mrb[0].mxu0
    %v724 = vadd.f32 0.0, %v723
    %v725 = vpop.f32.mrb[0].mxu0
    %v726 = vpop.f32.mrb[0].mxu0
    %727 = vdwg.mxu0
    %v728 = vadd.f32 %v178, %v681
    %v729 = vadd.f32 %v179, %v683
    %v730 = vadd.f32 %v180, %v722
    %v731 = vadd.f32 %v181, %v724
    %v732 = vtanh.pop %v728
    %v733 = vtanh.pop %v729
    %v734 = vtanh.pop %v730
    %v735 = vtanh.pop %v731
    %v736 = vmul.f32 %v732, %v490
    %v737 = vmul.f32 %v733, %v494
    %v738 = vmul.f32 %v734, %v498
    %v739 = vmul.f32 %v735, %v502
    %v740 = vadd.f32 %v736, %v515
    %v741 = vadd.f32 %v737, %v519
    %v742 = vadd.f32 %v738, %v523
    %v743 = vadd.f32 %v739, %v527
    %v744 = vmul.f32 %v741, %v642
    %v745 = vmul.f32 %v740, %v742
    %v746 = vadd.f32 %v744, %v745
    %v747 = vtanh.pop %v746
    %v748 = vmul.f32 %v743, %v747
    %v749 = vpack.c.bf16 %v748, %v748
    %750 = vmatprep.subr.bf16.mxu0 %v333
    %751 = vmatpush1.bf16.msra.mxu0 %v332
    %752 = vmatprep.subr.bf16.mxu0 %v337
    %753 = vmatpush1.bf16.msra.mxu0 %v336
    %754 = vmatprep.subr.bf16.mxu0 %v341
    %755 = vmatpush1.bf16.msra.mxu0 %v340
    %756 = vmatprep.subr.bf16.mxu0 %v345
    %757 = vmatpush1.bf16.msra.mxu0 %v344
    %758 = vmatprep.subr.bf16.mxu0 %v349
    %759 = vmatpush1.bf16.msra.mxu0 %v348
    %760 = vmatprep.subr.bf16.mxu0 %v353
    %761 = vmatpush1.bf16.msra.mxu0 %v352
    %762 = vmatprep.subr.bf16.mxu0 %v357
    %763 = vmatpush1.bf16.msra.mxu0 %v356
    %764 = vmatprep.subr.bf16.mxu0 %v361
    %765 = vmatpush1.bf16.msra.mxu0 %v360
    %766 = vmatprep.subr.bf16.mxu0 0
    %767 = vmatpush1.bf16.msra.mxu0 0
    %768 = vmatprep.subr.bf16.mxu0 0
    %769 = vmatpush1.bf16.msra.mxu0 0
    %770 = vmatprep.subr.bf16.mxu0 0
    %771 = vmatpush1.bf16.msra.mxu0 0
    %772 = vmatprep.subr.bf16.mxu0 0
    %773 = vmatpush1.bf16.msra.mxu0 0
    %774 = vmatprep.subr.bf16.mxu0 0
    %775 = vmatpush1.bf16.msra.mxu0 0
    %776 = vmatprep.subr.bf16.mxu0 0
    %777 = vmatpush1.bf16.msra.mxu0 0
    %778 = vmatprep.subr.bf16.mxu0 0
    %779 = vmatpush1.bf16.msra.mxu0 0
    %780 = vmatprep.subr.bf16.mxu0 0
    %781 = vmatpush1.bf16.msra.mxu0 0
    %782 = vmatprep.mubr.bf16.mxu0 0
    %783 = vmatmul.mubr.bf16.gmra.mrb[0].mxu0 %v749
    %v784 = vpop.f32.mrb[0].mxu0
    %v785 = vadd.f32 0.0, %v784
    %v786 = vpop.f32.mrb[0].mxu0
    %v787 = vadd.f32 0.0, %v786
    %v788 = vpop.f32.mrb[0].mxu0
    %v789 = vpop.f32.mrb[0].mxu0
    %790 = vdwg.mxu0
    %791 = vmatprep.subr.bf16.mxu0 %v335
    %792 = vmatpush1.bf16.msra.mxu0 %v334
    %793 = vmatprep.subr.bf16.mxu0 %v339
    %794 = vmatpush1.bf16.msra.mxu0 %v338
    %795 = vmatprep.subr.bf16.mxu0 %v343
    %796 = vmatpush1.bf16.msra.mxu0 %v342
    %797 = vmatprep.subr.bf16.mxu0 %v347
    %798 = vmatpush1.bf16.msra.mxu0 %v346
    %799 = vmatprep.subr.bf16.mxu0 %v351
    %800 = vmatpush1.bf16.msra.mxu0 %v350
    %801 = vmatprep.subr.bf16.mxu0 %v355
    %802 = vmatpush1.bf16.msra.mxu0 %v354
    %803 = vmatprep.subr.bf16.mxu0 %v359
    %804 = vmatpush1.bf16.msra.mxu0 %v358
    %805 = vmatprep.subr.bf16.mxu0 %v363
    %806 = vmatpush1.bf16.msra.mxu0 %v362
    %807 = vmatprep.subr.bf16.mxu0 0
    %808 = vmatpush1.bf16.msra.mxu0 0
    %809 = vmatprep.subr.bf16.mxu0 0
    %810 = vmatpush1.bf16.msra.mxu0 0
    %811 = vmatprep.subr.bf16.mxu0 0
    %812 = vmatpush1.bf16.msra.mxu0 0
    %813 = vmatprep.subr.bf16.mxu0 0
    %814 = vmatpush1.bf16.msra.mxu0 0
    %815 = vmatprep.subr.bf16.mxu0 0
    %816 = vmatpush1.bf16.msra.mxu0 0
    %817 = vmatprep.subr.bf16.mxu0 0
    %818 = vmatpush1.bf16.msra.mxu0 0
    %819 = vmatprep.subr.bf16.mxu0 0
    %820 = vmatpush1.bf16.msra.mxu0 0
    %821 = vmatprep.subr.bf16.mxu0 0
    %822 = vmatpush1.bf16.msra.mxu0 0
    %823 = vmatprep.mubr.bf16.mxu0 0
    %824 = vmatmul.mubr.bf16.gmra.mrb[0].mxu0 %v749
    %v825 = vpop.f32.mrb[0].mxu0
    %v826 = vadd.f32 0.0, %v825
    %v827 = vpop.f32.mrb[0].mxu0
    %v828 = vadd.f32 0.0, %v827
    %v829 = vpop.f32.mrb[0].mxu0
    %v830 = vpop.f32.mrb[0].mxu0
    %831 = vdwg.mxu0
    %v832 = vadd.f32 %v182, %v785
    %v833 = vadd.f32 %v183, %v787
    %v834 = vadd.f32 %v184, %v826
    %v835 = vadd.f32 %v185, %v828
    %v836 = vtanh.pop %v832
    %v837 = vtanh.pop %v833
    %v838 = vtanh.pop %v834
    %v839 = vtanh.pop %v835
    %v840 = vmul.f32 %v836, %v490
    %v841 = vmul.f32 %v837, %v494
    %v842 = vmul.f32 %v838, %v498
    %v843 = vmul.f32 %v839, %v502
    %v844 = vadd.f32 %v840, %v515
    %v845 = vadd.f32 %v841, %v519
    %v846 = vadd.f32 %v842, %v523
    %v847 = vadd.f32 %v843, %v527
    %v848 = vmul.f32 %v845, %v746
    %v849 = vmul.f32 %v844, %v846
    %v850 = vadd.f32 %v848, %v849
    %v851 = vtanh.pop %v850
    %v852 = vmul.f32 %v847, %v851
    %v853 = vpack.c.bf16 %v852, %v852
    %854 = vmatprep.subr.bf16.mxu0 %v333
    %855 = vmatpush1.bf16.msra.mxu0 %v332
    %856 = vmatprep.subr.bf16.mxu0 %v337
    %857 = vmatpush1.bf16.msra.mxu0 %v336
    %858 = vmatprep.subr.bf16.mxu0 %v341
    %859 = vmatpush1.bf16.msra.mxu0 %v340
    %860 = vmatprep.subr.bf16.mxu0 %v345
    %861 = vmatpush1.bf16.msra.mxu0 %v344
    %862 = vmatprep.subr.bf16.mxu0 %v349
    %863 = vmatpush1.bf16.msra.mxu0 %v348
    %864 = vmatprep.subr.bf16.mxu0 %v353
    %865 = vmatpush1.bf16.msra.mxu0 %v352
    %866 = vmatprep.subr.bf16.mxu0 %v357
    %867 = vmatpush1.bf16.msra.mxu0 %v356
    %868 = vmatprep.subr.bf16.mxu0 %v361
    %869 = vmatpush1.bf16.msra.mxu0 %v360
    %870 = vmatprep.subr.bf16.mxu0 0
    %871 = vmatpush1.bf16.msra.mxu0 0
    %872 = vmatprep.subr.bf16.mxu0 0
    %873 = vmatpush1.bf16.msra.mxu0 0
    %874 = vmatprep.subr.bf16.mxu0 0
    %875 = vmatpush1.bf16.msra.mxu0 0
    %876 = vmatprep.subr.bf16.mxu0 0
    %877 = vmatpush1.bf16.msra.mxu0 0
    %878 = vmatprep.subr.bf16.mxu0 0
    %879 = vmatpush1.bf16.msra.mxu0 0
    %880 = vmatprep.subr.bf16.mxu0 0
    %881 = vmatpush1.bf16.msra.mxu0 0
    %882 = vmatprep.subr.bf16.mxu0 0
    %883 = vmatpush1.bf16.msra.mxu0 0
    %884 = vmatprep.subr.bf16.mxu0 0
    %885 = vmatpush1.bf16.msra.mxu0 0
    %886 = vmatprep.mubr.bf16.mxu0 0
    %887 = vmatmul.mubr.bf16.gmra.mrb[0].mxu0 %v853
    %v888 = vpop.f32.mrb[0].mxu0
    %v889 = vadd.f32 0.0, %v888
    %v890 = vpop.f32.mrb[0].mxu0
    %v891 = vadd.f32 0.0, %v890
    %v892 = vpop.f32.mrb[0].mxu0
    %v893 = vpop.f32.mrb[0].mxu0
    %894 = vdwg.mxu0
    %895 = vmatprep.subr.bf16.mxu0 %v335
    %896 = vmatpush1.bf16.msra.mxu0 %v334
    %897 = vmatprep.subr.bf16.mxu0 %v339
    %898 = vmatpush1.bf16.msra.mxu0 %v338
    %899 = vmatprep.subr.bf16.mxu0 %v343
    %900 = vmatpush1.bf16.msra.mxu0 %v342
    %901 = vmatprep.subr.bf16.mxu0 %v347
    %902 = vmatpush1.bf16.msra.mxu0 %v346
    %903 = vmatprep.subr.bf16.mxu0 %v351
    %904 = vmatpush1.bf16.msra.mxu0 %v350
    %905 = vmatprep.subr.bf16.mxu0 %v355
    %906 = vmatpush1.bf16.msra.mxu0 %v354
    %907 = vmatprep.subr.bf16.mxu0 %v359
    %908 = vmatpush1.bf16.msra.mxu0 %v358
    %909 = vmatprep.subr.bf16.mxu0 %v363
    %910 = vmatpush1.bf16.msra.mxu0 %v362
    %911 = vmatprep.subr.bf16.mxu0 0
    %912 = vmatpush1.bf16.msra.mxu0 0
    %913 = vmatprep.subr.bf16.mxu0 0
    %914 = vmatpush1.bf16.msra.mxu0 0
    %915 = vmatprep.subr.bf16.mxu0 0
    %916 = vmatpush1.bf16.msra.mxu0 0
    %917 = vmatprep.subr.bf16.mxu0 0
    %918 = vmatpush1.bf16.msra.mxu0 0
    %919 = vmatprep.subr.bf16.mxu0 0
    %920 = vmatpush1.bf16.msra.mxu0 0
    %921 = vmatprep.subr.bf16.mxu0 0
    %922 = vmatpush1.bf16.msra.mxu0 0
    %923 = vmatprep.subr.bf16.mxu0 0
    %924 = vmatpush1.bf16.msra.mxu0 0
    %925 = vmatprep.subr.bf16.mxu0 0
    %926 = vmatpush1.bf16.msra.mxu0 0
    %927 = vmatprep.mubr.bf16.mxu0 0
    %928 = vmatmul.mubr.bf16.gmra.mrb[0].mxu0 %v853
    %v929 = vpop.f32.mrb[0].mxu0
    %v930 = vadd.f32 0.0, %v929
    %v931 = vpop.f32.mrb[0].mxu0
    %v932 = vadd.f32 0.0, %v931
    %v933 = vpop.f32.mrb[0].mxu0
    %v934 = vpop.f32.mrb[0].mxu0
    %935 = vdwg.mxu0
    %v936 = vadd.f32 %v186, %v889
    %v937 = vadd.f32 %v187, %v891
    %v938 = vadd.f32 %v188, %v930
    %v939 = vadd.f32 %v189, %v932
    %v940 = vtanh.pop %v936
    %v941 = vtanh.pop %v937
    %v942 = vtanh.pop %v938
    %v943 = vtanh.pop %v939
    %v944 = vmul.f32 %v940, %v490
    %v945 = vmul.f32 %v941, %v494
    %v946 = vmul.f32 %v942, %v498
    %v947 = vmul.f32 %v943, %v502
    %v948 = vadd.f32 %v944, %v515
    %v949 = vadd.f32 %v945, %v519
    %v950 = vadd.f32 %v946, %v523
    %v951 = vadd.f32 %v947, %v527
    %v952 = vmul.f32 %v949, %v850
    %v953 = vmul.f32 %v948, %v950
    %v954 = vadd.f32 %v952, %v953
    %v955 = vtanh.pop %v954
    %v956 = vmul.f32 %v951, %v955
    %v957 = vpack.c.bf16 %v956, %v956
    %958 = vmatprep.subr.bf16.mxu0 %v333
    %959 = vmatpush1.bf16.msra.mxu0 %v332
    %960 = vmatprep.subr.bf16.mxu0 %v337
    %961 = vmatpush1.bf16.msra.mxu0 %v336
    %962 = vmatprep.subr.bf16.mxu0 %v341
    %963 = vmatpush1.bf16.msra.mxu0 %v340
    %964 = vmatprep.subr.bf16.mxu0 %v345
    %965 = vmatpush1.bf16.msra.mxu0 %v344
    %966 = vmatprep.subr.bf16.mxu0 %v349
    %967 = vmatpush1.bf16.msra.mxu0 %v348
    %968 = vmatprep.subr.bf16.mxu0 %v353
    %969 = vmatpush1.bf16.msra.mxu0 %v352
    %970 = vmatprep.subr.bf16.mxu0 %v357
    %971 = vmatpush1.bf16.msra.mxu0 %v356
    %972 = vmatprep.subr.bf16.mxu0 %v361
    %973 = vmatpush1.bf16.msra.mxu0 %v360
    %974 = vmatprep.subr.bf16.mxu0 0
    %975 = vmatpush1.bf16.msra.mxu0 0
    %976 = vmatprep.subr.bf16.mxu0 0
    %977 = vmatpush1.bf16.msra.mxu0 0
    %978 = vmatprep.subr.bf16.mxu0 0
    %979 = vmatpush1.bf16.msra.mxu0 0
    %980 = vmatprep.subr.bf16.mxu0 0
    %981 = vmatpush1.bf16.msra.mxu0 0
    %982 = vmatprep.subr.bf16.mxu0 0
    %983 = vmatpush1.bf16.msra.mxu0 0
    %984 = vmatprep.subr.bf16.mxu0 0
    %985 = vmatpush1.bf16.msra.mxu0 0
    %986 = vmatprep.subr.bf16.mxu0 0
    %987 = vmatpush1.bf16.msra.mxu0 0
    %988 = vmatprep.subr.bf16.mxu0 0
    %989 = vmatpush1.bf16.msra.mxu0 0
    %990 = vmatprep.mubr.bf16.mxu0 0
    %991 = vmatmul.mubr.bf16.gmra.mrb[0].mxu0 %v957
    %v992 = vpop.f32.mrb[0].mxu0
    %v993 = vadd.f32 0.0, %v992
    %v994 = vpop.f32.mrb[0].mxu0
    %v995 = vadd.f32 0.0, %v994
    %v996 = vpop.f32.mrb[0].mxu0
    %v997 = vpop.f32.mrb[0].mxu0
    %998 = vdwg.mxu0
    %999 = vmatprep.subr.bf16.mxu0 %v335
    %1000 = vmatpush1.bf16.msra.mxu0 %v334
    %1001 = vmatprep.subr.bf16.mxu0 %v339
    %1002 = vmatpush1.bf16.msra.mxu0 %v338
    %1003 = vmatprep.subr.bf16.mxu0 %v343
    %1004 = vmatpush1.bf16.msra.mxu0 %v342
    %1005 = vmatprep.subr.bf16.mxu0 %v347
    %1006 = vmatpush1.bf16.msra.mxu0 %v346
    %1007 = vmatprep.subr.bf16.mxu0 %v351
    %1008 = vmatpush1.bf16.msra.mxu0 %v350
    %1009 = vmatprep.subr.bf16.mxu0 %v355
    %1010 = vmatpush1.bf16.msra.mxu0 %v354
    %1011 = vmatprep.subr.bf16.mxu0 %v359
    %1012 = vmatpush1.bf16.msra.mxu0 %v358
    %1013 = vmatprep.subr.bf16.mxu0 %v363
    %1014 = vmatpush1.bf16.msra.mxu0 %v362
    %1015 = vmatprep.subr.bf16.mxu0 0
    %1016 = vmatpush1.bf16.msra.mxu0 0
    %1017 = vmatprep.subr.bf16.mxu0 0
    %1018 = vmatpush1.bf16.msra.mxu0 0
    %1019 = vmatprep.subr.bf16.mxu0 0
    %1020 = vmatpush1.bf16.msra.mxu0 0
    %1021 = vmatprep.subr.bf16.mxu0 0
    %1022 = vmatpush1.bf16.msra.mxu0 0
    %1023 = vmatprep.subr.bf16.mxu0 0
    %1024 = vmatpush1.bf16.msra.mxu0 0
    %1025 = vmatprep.subr.bf16.mxu0 0
    %1026 = vmatpush1.bf16.msra.mxu0 0
    %1027 = vmatprep.subr.bf16.mxu0 0
    %1028 = vmatpush1.bf16.msra.mxu0 0
    %1029 = vmatprep.subr.bf16.mxu0 0
    %1030 = vmatpush1.bf16.msra.mxu0 0
    %1031 = vmatprep.mubr.bf16.mxu0 0
    %1032 = vmatmul.mubr.bf16.gmra.mrb[0].mxu0 %v957
    %v1033 = vpop.f32.mrb[0].mxu0
    %v1034 = vadd.f32 0.0, %v1033
    %v1035 = vpop.f32.mrb[0].mxu0
    %v1036 = vadd.f32 0.0, %v1035
    %v1037 = vpop.f32.mrb[0].mxu0
    %v1038 = vpop.f32.mrb[0].mxu0
    %1039 = vdwg.mxu0
    %v1040 = vadd.f32 %v190, %v993
    %v1041 = vadd.f32 %v191, %v995
    %v1042 = vadd.f32 %v192, %v1034
    %v1043 = vadd.f32 %v193, %v1036
    %v1044 = vtanh.pop %v1040
    %v1045 = vtanh.pop %v1041
    %v1046 = vtanh.pop %v1042
    %v1047 = vtanh.pop %v1043
    %v1048 = vmul.f32 %v1044, %v490
    %v1049 = vmul.f32 %v1045, %v494
    %v1050 = vmul.f32 %v1046, %v498
    %v1051 = vmul.f32 %v1047, %v502
    %v1052 = vadd.f32 %v1048, %v515
    %v1053 = vadd.f32 %v1049, %v519
    %v1054 = vadd.f32 %v1050, %v523
    %v1055 = vadd.f32 %v1051, %v527
    %v1056 = vmul.f32 %v1053, %v954
    %v1057 = vmul.f32 %v1052, %v1054
    %v1058 = vadd.f32 %v1056, %v1057
    %v1059 = vtanh.pop %v1058
    %v1060 = vmul.f32 %v1055, %v1059
    %v1061 = vpack.c.bf16 %v1060, %v1060
    %1062 = vmatprep.subr.bf16.mxu0 %v333
    %1063 = vmatpush1.bf16.msra.mxu0 %v332
    %1064 = vmatprep.subr.bf16.mxu0 %v337
    %1065 = vmatpush1.bf16.msra.mxu0 %v336
    %1066 = vmatprep.subr.bf16.mxu0 %v341
    %1067 = vmatpush1.bf16.msra.mxu0 %v340
    %1068 = vmatprep.subr.bf16.mxu0 %v345
    %1069 = vmatpush1.bf16.msra.mxu0 %v344
    %1070 = vmatprep.subr.bf16.mxu0 %v349
    %1071 = vmatpush1.bf16.msra.mxu0 %v348
    %1072 = vmatprep.subr.bf16.mxu0 %v353
    %1073 = vmatpush1.bf16.msra.mxu0 %v352
    %1074 = vmatprep.subr.bf16.mxu0 %v357
    %1075 = vmatpush1.bf16.msra.mxu0 %v356
    %1076 = vmatprep.subr.bf16.mxu0 %v361
    %1077 = vmatpush1.bf16.msra.mxu0 %v360
    %1078 = vmatprep.subr.bf16.mxu0 0
    %1079 = vmatpush1.bf16.msra.mxu0 0
    %1080 = vmatprep.subr.bf16.mxu0 0
    %1081 = vmatpush1.bf16.msra.mxu0 0
    %1082 = vmatprep.subr.bf16.mxu0 0
    %1083 = vmatpush1.bf16.msra.mxu0 0
    %1084 = vmatprep.subr.bf16.mxu0 0
    %1085 = vmatpush1.bf16.msra.mxu0 0
    %1086 = vmatprep.subr.bf16.mxu0 0
    %1087 = vmatpush1.bf16.msra.mxu0 0
    %1088 = vmatprep.subr.bf16.mxu0 0
    %1089 = vmatpush1.bf16.msra.mxu0 0
    %1090 = vmatprep.subr.bf16.mxu0 0
    %1091 = vmatpush1.bf16.msra.mxu0 0
    %1092 = vmatprep.subr.bf16.mxu0 0
    %1093 = vmatpush1.bf16.msra.mxu0 0
    %1094 = vmatprep.mubr.bf16.mxu0 0
    %1095 = vmatmul.mubr.bf16.gmra.mrb[0].mxu0 %v1061
    %v1096 = vpop.f32.mrb[0].mxu0
    %v1097 = vadd.f32 0.0, %v1096
    %v1098 = vpop.f32.mrb[0].mxu0
    %v1099 = vadd.f32 0.0, %v1098
    %v1100 = vpop.f32.mrb[0].mxu0
    %v1101 = vpop.f32.mrb[0].mxu0
    %1102 = vdwg.mxu0
    %1103 = vmatprep.subr.bf16.mxu0 %v335
    %1104 = vmatpush1.bf16.msra.mxu0 %v334
    %1105 = vmatprep.subr.bf16.mxu0 %v339
    %1106 = vmatpush1.bf16.msra.mxu0 %v338
    %1107 = vmatprep.subr.bf16.mxu0 %v343
    %1108 = vmatpush1.bf16.msra.mxu0 %v342
    %1109 = vmatprep.subr.bf16.mxu0 %v347
    %1110 = vmatpush1.bf16.msra.mxu0 %v346
    %1111 = vmatprep.subr.bf16.mxu0 %v351
    %1112 = vmatpush1.bf16.msra.mxu0 %v350
    %1113 = vmatprep.subr.bf16.mxu0 %v355
    %1114 = vmatpush1.bf16.msra.mxu0 %v354
    %1115 = vmatprep.subr.bf16.mxu0 %v359
    %1116 = vmatpush1.bf16.msra.mxu0 %v358
    %1117 = vmatprep.subr.bf16.mxu0 %v363
    %1118 = vmatpush1.bf16.msra.mxu0 %v362
    %1119 = vmatprep.subr.bf16.mxu0 0
    %1120 = vmatpush1.bf16.msra.mxu0 0
    %1121 = vmatprep.subr.bf16.mxu0 0
    %1122 = vmatpush1.bf16.msra.mxu0 0
    %1123 = vmatprep.subr.bf16.mxu0 0
    %1124 = vmatpush1.bf16.msra.mxu0 0
    %1125 = vmatprep.subr.bf16.mxu0 0
    %1126 = vmatpush1.bf16.msra.mxu0 0
    %1127 = vmatprep.subr.bf16.mxu0 0
    %1128 = vmatpush1.bf16.msra.mxu0 0
    %1129 = vmatprep.subr.bf16.mxu0 0
    %1130 = vmatpush1.bf16.msra.mxu0 0
    %1131 = vmatprep.subr.bf16.mxu0 0
    %1132 = vmatpush1.bf16.msra.mxu0 0
    %1133 = vmatprep.subr.bf16.mxu0 0
    %1134 = vmatpush1.bf16.msra.mxu0 0
    %1135 = vmatprep.mubr.bf16.mxu0 0
    %1136 = vmatmul.mubr.bf16.gmra.mrb[0].mxu0 %v1061
    %v1137 = vpop.f32.mrb[0].mxu0
    %v1138 = vadd.f32 0.0, %v1137
    %v1139 = vpop.f32.mrb[0].mxu0
    %v1140 = vadd.f32 0.0, %v1139
    %v1141 = vpop.f32.mrb[0].mxu0
    %v1142 = vpop.f32.mrb[0].mxu0
    %1143 = vdwg.mxu0
    %v1144 = vadd.f32 %v194, %v1097
    %v1145 = vadd.f32 %v195, %v1099
    %v1146 = vadd.f32 %v196, %v1138
    %v1147 = vadd.f32 %v197, %v1140
    %v1148 = vtanh.pop %v1144
    %v1149 = vtanh.pop %v1145
    %v1150 = vtanh.pop %v1146
    %v1151 = vtanh.pop %v1147
    %v1152 = vmul.f32 %v1148, %v490
    %v1153 = vmul.f32 %v1149, %v494
    %v1154 = vmul.f32 %v1150, %v498
    %v1155 = vmul.f32 %v1151, %v502
    %v1156 = vadd.f32 %v1152, %v515
    %v1157 = vadd.f32 %v1153, %v519
    %v1158 = vadd.f32 %v1154, %v523
    %v1159 = vadd.f32 %v1155, %v527
    %v1160 = vmul.f32 %v1157, %v1058
    %v1161 = vmul.f32 %v1156, %v1158
    %v1162 = vadd.f32 %v1160, %v1161
    %v1163 = vtanh.pop %v1162
    %v1164 = vmul.f32 %v1159, %v1163
    %v1165 = vpack.c.bf16 %v1164, %v1164
    %1166 = vmatprep.subr.bf16.mxu0 %v333
    %1167 = vmatpush1.bf16.msra.mxu0 %v332
    %1168 = vmatprep.subr.bf16.mxu0 %v337
    %1169 = vmatpush1.bf16.msra.mxu0 %v336
    %1170 = vmatprep.subr.bf16.mxu0 %v341
    %1171 = vmatpush1.bf16.msra.mxu0 %v340
    %1172 = vmatprep.subr.bf16.mxu0 %v345
    %1173 = vmatpush1.bf16.msra.mxu0 %v344
    %1174 = vmatprep.subr.bf16.mxu0 %v349
    %1175 = vmatpush1.bf16.msra.mxu0 %v348
    %1176 = vmatprep.subr.bf16.mxu0 %v353
    %1177 = vmatpush1.bf16.msra.mxu0 %v352
    %1178 = vmatprep.subr.bf16.mxu0 %v357
    %1179 = vmatpush1.bf16.msra.mxu0 %v356
    %1180 = vmatprep.subr.bf16.mxu0 %v361
    %1181 = vmatpush1.bf16.msra.mxu0 %v360
    %1182 = vmatprep.subr.bf16.mxu0 0
    %1183 = vmatpush1.bf16.msra.mxu0 0
    %1184 = vmatprep.subr.bf16.mxu0 0
    %1185 = vmatpush1.bf16.msra.mxu0 0
    %1186 = vmatprep.subr.bf16.mxu0 0
    %1187 = vmatpush1.bf16.msra.mxu0 0
    %1188 = vmatprep.subr.bf16.mxu0 0
    %1189 = vmatpush1.bf16.msra.mxu0 0
    %1190 = vmatprep.subr.bf16.mxu0 0
    %1191 = vmatpush1.bf16.msra.mxu0 0
    %1192 = vmatprep.subr.bf16.mxu0 0
    %1193 = vmatpush1.bf16.msra.mxu0 0
    %1194 = vmatprep.subr.bf16.mxu0 0
    %1195 = vmatpush1.bf16.msra.mxu0 0
    %1196 = vmatprep.subr.bf16.mxu0 0
    %1197 = vmatpush1.bf16.msra.mxu0 0
    %1198 = vmatprep.mubr.bf16.mxu0 0
    %1199 = vmatmul.mubr.bf16.gmra.mrb[0].mxu0 %v1165
    %v1200 = vpop.f32.mrb[0].mxu0
    %v1201 = vadd.f32 0.0, %v1200
    %v1202 = vpop.f32.mrb[0].mxu0
    %v1203 = vadd.f32 0.0, %v1202
    %v1204 = vpop.f32.mrb[0].mxu0
    %v1205 = vpop.f32.mrb[0].mxu0
    %1206 = vdwg.mxu0
    %1207 = vmatprep.subr.bf16.mxu0 %v335
    %1208 = vmatpush1.bf16.msra.mxu0 %v334
    %1209 = vmatprep.subr.bf16.mxu0 %v339
    %1210 = vmatpush1.bf16.msra.mxu0 %v338
    %1211 = vmatprep.subr.bf16.mxu0 %v343
    %1212 = vmatpush1.bf16.msra.mxu0 %v342
    %1213 = vmatprep.subr.bf16.mxu0 %v347
    %1214 = vmatpush1.bf16.msra.mxu0 %v346
    %1215 = vmatprep.subr.bf16.mxu0 %v351
    %1216 = vmatpush1.bf16.msra.mxu0 %v350
    %1217 = vmatprep.subr.bf16.mxu0 %v355
    %1218 = vmatpush1.bf16.msra.mxu0 %v354
    %1219 = vmatprep.subr.bf16.mxu0 %v359
    %1220 = vmatpush1.bf16.msra.mxu0 %v358
    %1221 = vmatprep.subr.bf16.mxu0 %v363
    %1222 = vmatpush1.bf16.msra.mxu0 %v362
    %1223 = vmatprep.subr.bf16.mxu0 0
    %1224 = vmatpush1.bf16.msra.mxu0 0
    %1225 = vmatprep.subr.bf16.mxu0 0
    %1226 = vmatpush1.bf16.msra.mxu0 0
    %1227 = vmatprep.subr.bf16.mxu0 0
    %1228 = vmatpush1.bf16.msra.mxu0 0
    %1229 = vmatprep.subr.bf16.mxu0 0
    %1230 = vmatpush1.bf16.msra.mxu0 0
    %1231 = vmatprep.subr.bf16.mxu0 0
    %1232 = vmatpush1.bf16.msra.mxu0 0
    %1233 = vmatprep.subr.bf16.mxu0 0
    %1234 = vmatpush1.bf16.msra.mxu0 0
    %1235 = vmatprep.subr.bf16.mxu0 0
    %1236 = vmatpush1.bf16.msra.mxu0 0
    %1237 = vmatprep.subr.bf16.mxu0 0
    %1238 = vmatpush1.bf16.msra.mxu0 0
    %1239 = vmatprep.mubr.bf16.mxu0 0
    %1240 = vmatmul.mubr.bf16.gmra.mrb[0].mxu0 %v1165
    %v1241 = vpop.f32.mrb[0].mxu0
    %v1242 = vadd.f32 0.0, %v1241
    %v1243 = vpop.f32.mrb[0].mxu0
    %v1244 = vadd.f32 0.0, %v1243
    %v1245 = vpop.f32.mrb[0].mxu0
    %v1246 = vpop.f32.mrb[0].mxu0
    %1247 = vdwg.mxu0
    %v1248 = vadd.f32 %v198, %v1201
    %v1249 = vadd.f32 %v199, %v1203
    %v1250 = vadd.f32 %v200, %v1242
    %v1251 = vadd.f32 %v201, %v1244
    %v1252 = vtanh.pop %v1248
    %v1253 = vtanh.pop %v1249
    %v1254 = vtanh.pop %v1250
    %v1255 = vtanh.pop %v1251
    %v1256 = vmul.f32 %v1252, %v490
    %v1257 = vmul.f32 %v1253, %v494
    %v1258 = vmul.f32 %v1254, %v498
    %v1259 = vmul.f32 %v1255, %v502
    %v1260 = vadd.f32 %v1256, %v515
    %v1261 = vadd.f32 %v1257, %v519
    %v1262 = vadd.f32 %v1258, %v523
    %v1263 = vadd.f32 %v1259, %v527
    %v1264 = vmul.f32 %v1261, %v1162
    %v1265 = vmul.f32 %v1260, %v1262
    %v1266 = vadd.f32 %v1264, %v1265
    %v1267 = vtanh.pop %v1266
    %v1268 = vmul.f32 %v1263, %v1267
    %v1269 = vld [vmem:[%s6] sm:$0x1]
    %v1271 = vlaneseq
    %v1272 = vshrl.u32 %v1271, 7
    %v1273 = vsub.s32 0, %v1272
    %v1274 = vrot.slane %v1269, %v1273
    %v1276 = vmul.f32 %v1268, %v1274
    %vm1277 = vcmask 1041408
    %v1278 = vsel %vm1277, %v1276, 0.0
    %1279 = vadd.xlane.f32.xlu0 %v1278
    %v1280 = vpop.xlane.xlu0 %1279
    %v1281 = vld [vmem:[#allocation2] sm:$0x1]
    %v1283 = vlaneseq
    %v1284 = vshrl.u32 %v1283, 7
    %v1285 = vsub.s32 0, %v1284
    %v1286 = vrot.slane %v1281, %v1285
    %v1288 = vadd.f32 %v1280, %v1286
    %vm1289 = vcmask 1024
    %1290 = vst.msk [vmem:[%s8] sm:$0x3] %vm1289, %v1288
    // Predicated region
    $region38: #{tpu_custom_call.1} parent=1 // pred_check
      _
    $region39: #{tpu_custom_call.1} parent=1 // pred_check_branch
      %1292 = sbr.rel (0) target = $region41
    $region40: #{tpu_custom_call.1} parent=1 // pred_region
      _
    $region41: #{tpu_custom_call.1} parent=1 // pred_fallthru
      _
    // Predicated region
    $region42: #{tpu_custom_call.1} parent=1 // pred_check
      _
    $region43: #{tpu_custom_call.1} parent=1 // pred_check_branch
      %1294 = sbr.rel (0) target = $region45
    $region44: #{tpu_custom_call.1} parent=1 // pred_region
      _
    $region45: #{tpu_custom_call.1} parent=1 // pred_fallthru
      _
    %1295 = vsyncpa [#allocation4], 1

</llo_original>
